<compile_context>
chip_gen: v5e
topology: v5e:2x2
jax: 0.10.0
libtpu: 0.0.40
codegen_flags: <defaults>
</compile_context>

<pallas_src>
import jax
import jax.numpy as jnp
from jax.experimental import pallas as pl
from jax.experimental.pallas import tpu as pltpu


# ---------------------------------------------------------------------------
# Helpers
# ---------------------------------------------------------------------------
def _round_up(x, m):
    return ((x + m - 1) // m) * m


def _vmem_budget_bytes():
    """Per-generation scoped-VMEM budget (≈48 MiB on v7x, ≈96 MiB on v5e/v6e)."""
    cap = 64 * 1024 * 1024
    try:
        info = pltpu.get_tpu_info()
        cap = int(getattr(info, "vmem_capacity_bytes", cap) or cap)
    except Exception:
        pass
    return min((cap * 3) // 4, 96 * 1024 * 1024)


# ---------------------------------------------------------------------------
# Kernels
# ---------------------------------------------------------------------------
def conv1_kernel(a_ref, z_ref, b1_ref, h_ref):
    # A row tile (TM, Np) bf16 @ Z (Np, 16) bf16 -> f32 accumulation on MXU.
    agg = jnp.dot(a_ref[...], z_ref[...], preferred_element_type=jnp.float32)
    h_ref[...] = jnp.maximum(agg + b1_ref[...], 0.0).astype(h_ref.dtype)
    # F.dropout(x, training=self.training)
    # TODO(synk): training-mode dropout (stochastic mask) is not reproduced;
    # eval-mode (identity) semantics are used here.


def conv2_head_kernel(a_ref, h2_ref, b2_ref, wl_ref, bl_ref, slab_ref):
    # x2 = A_tile @ (H @ W2) + b2   (H @ W2 precomputed in the wrapper, bf16)
    x2 = jnp.dot(a_ref[...], h2_ref[...],
                 preferred_element_type=jnp.float32) + b2_ref[...]
    r = jnp.maximum(x2, 0.0)
    # Head Linear(2, 1) on the VPU with SMEM scalar weights, sigmoid on EUP.
    out_col = jax.nn.sigmoid(
        r[:, 0:1] * wl_ref[0] + r[:, 1:2] * wl_ref[1] + bl_ref[0])
    # Lane-dense (TM, 128) bf16 slab: zero fill + two narrow VMEM stores.
    slab_ref[...] = jnp.zeros_like(slab_ref)
    slab_ref[:, 0:1] = out_col.astype(slab_ref.dtype)
    slab_ref[:, 1:3] = x2.astype(slab_ref.dtype)


def fused_kernel(a_ref, z_ref, b1_ref, w2_ref, b2_ref, wl_ref, bl_ref, slab_ref):
    # Both GCN layers + head with A_hat resident in VMEM (loaded once).
    h = jnp.maximum(
        jnp.dot(a_ref[...], z_ref[...], preferred_element_type=jnp.float32)
        + b1_ref[...], 0.0)
    h2 = jnp.dot(h.astype(jnp.bfloat16), w2_ref[...],
                 preferred_element_type=jnp.float32)
    x2 = jnp.dot(a_ref[...], h2.astype(jnp.bfloat16),
                 preferred_element_type=jnp.float32) + b2_ref[...]
    r = jnp.maximum(x2, 0.0)
    out_col = jax.nn.sigmoid(
        r[:, 0:1] * wl_ref[0] + r[:, 1:2] * wl_ref[1] + bl_ref[0])
    slab_ref[...] = jnp.zeros_like(slab_ref)
    slab_ref[:, 0:1] = out_col.astype(slab_ref.dtype)
    slab_ref[:, 1:3] = x2.astype(slab_ref.dtype)


# ---------------------------------------------------------------------------
# Dense GCN-normalized adjacency (matches PyG gcn_norm with self-loops),
# built directly at the padded shape in the requested dtype.
# ---------------------------------------------------------------------------
def build_gcn_adj(edge_index, edge_weight, n, n_pad=None, dtype=jnp.float32):
    if n_pad is None:
        n_pad = n
    row, col = edge_index[0], edge_index[1]
    loop = jnp.arange(n, dtype=row.dtype)
    row = jnp.concatenate([row, loop])
    col = jnp.concatenate([col, loop])
    ew = jnp.concatenate([edge_weight, jnp.ones((n,), edge_weight.dtype)])

    deg = jnp.zeros((n,), jnp.float32).at[col].add(ew)
    deg_inv_sqrt = jnp.where(deg > 0, jax.lax.rsqrt(deg), 0.0)
    norm = deg_inv_sqrt[row] * ew * deg_inv_sqrt[col]

    # out[target] += norm * x[source]  ->  A_hat[target, source] = norm
    a_hat = jnp.zeros((n_pad, n_pad), jnp.float32).at[col, row].add(norm)
    return a_hat.astype(dtype)
    # TODO(synk): for genuinely sparse graphs at scale, replace this dense
    # O(N^2) formulation with a scalar-prefetch gather/aggregate kernel.


# ---------------------------------------------------------------------------
# Wrapper
# ---------------------------------------------------------------------------
def gnn_forward(x, edge_index, edge_weight, params, *, tm=None,
                force_two_pass=False):
    n = x.shape[0]
    vmem_budget = _vmem_budget_bytes()

    n16 = _round_up(n, 16)
    a_bytes_fused = 2 * n16 * n16                       # bf16 A resident
    fused = (not force_two_pass) and \
        (a_bytes_fused + 512 * n16 + (4 << 20) <= vmem_budget)

    if fused:
        n_pad = n16
    else:
        if tm is None:
            # Size the bf16 A row tile from a per-generation byte budget,
            # rounded to a multiple of 128 (bf16 sublane packing + MXU),
            # capped so the "parallel" axis keeps >= 2 steps (megacore).
            tile_budget = min(8 * 1024 * 1024, vmem_budget // 5)
            tm = (tile_budget // max(1, 2 * n)) // 128 * 128
            tm = max(128, min(2048, tm))
            if n > 128:
                tm = min(tm, _round_up(-(-n // 2), 128))
        tm = max(128, (tm // 128) * 128)
        n_pad = _round_up(n, tm)

    # A_hat built directly at padded size in bf16 (no extra cast+pad copy).
    a = build_gcn_adj(edge_index, edge_weight, n, n_pad=n_pad,
                      dtype=jnp.bfloat16)

    # Hoisted projection Z = X @ W1 (computed once, not once per grid step).
    z = jnp.pad(x @ params["w1"], ((0, n_pad - n), (0, 0))).astype(jnp.bfloat16)

    b1 = params["b1"].reshape(1, 16).astype(jnp.float32)
    b2 = params["b2"].reshape(1, 2).astype(jnp.float32)
    wl = params["wl"].reshape(2).astype(jnp.float32)
    bl = params["bl"].reshape(1).astype(jnp.float32)

    vmem = pl.BlockSpec(memory_space=pltpu.MemorySpace.VMEM)
    smem = pl.BlockSpec(memory_space=pltpu.MemorySpace.SMEM)

    if fused:
        slab = pl.pallas_call(
            fused_kernel,
            out_shape=jax.ShapeDtypeStruct((n_pad, 128), jnp.bfloat16),
            in_specs=[vmem, vmem, vmem, vmem, vmem, smem, smem],
            out_specs=vmem,
            compiler_params=pltpu.CompilerParams(vmem_limit_bytes=vmem_budget),
            cost_estimate=pl.CostEstimate(
                flops=2 * n_pad * n_pad * 18,
                transcendentals=n_pad,
                bytes_accessed=a_bytes_fused + 64 * n_pad + 256 * n_pad),
        )(a, z, b1, params["w2"].astype(jnp.bfloat16), b2, wl, bl)
    else:
        grid = (n_pad // tm,)
        cparams = pltpu.CompilerParams(
            dimension_semantics=("parallel",),   # megacore on v7x
            vmem_limit_bytes=vmem_budget,
        )

        # ---- pass 1: H = relu(A_hat @ Z + b1), bf16 output ----
        h = pl.pallas_call(
            conv1_kernel,
            out_shape=jax.ShapeDtypeStruct((n_pad, 16), jnp.bfloat16),
            grid=grid,
            in_specs=[
                pl.BlockSpec((tm, n_pad), lambda i: (i, 0)),   # A tile, pipelined
                vmem,                                          # Z (Np,16) bf16
                vmem,                                          # b1
            ],
            out_specs=pl.BlockSpec((tm, 16), lambda i: (i, 0)),
            compiler_params=cparams,
            cost_estimate=pl.CostEstimate(
                flops=2 * n_pad * n_pad * 16,
                transcendentals=0,
                bytes_accessed=2 * n_pad * n_pad + 64 * n_pad),
        )(a, z, b1)

        # Hoisted projection H2 = H @ W2 (tiny, done once).
        h2 = (h.astype(jnp.float32) @ params["w2"]).astype(jnp.bfloat16)

        # ---- pass 2: x2 = A_hat @ H2 + b2 ; out = sigmoid(relu(x2) @ Wl + bl)
        slab = pl.pallas_call(
            conv2_head_kernel,
            out_shape=jax.ShapeDtypeStruct((n_pad, 128), jnp.bfloat16),
            grid=grid,
            in_specs=[
                pl.BlockSpec((tm, n_pad), lambda i: (i, 0)),   # A tile, pipelined
                vmem,                                          # H2 (Np,2) bf16
                vmem,                                          # b2
                smem,                                          # Wl scalars (2,)
                smem,                                          # bl scalar  (1,)
            ],
            out_specs=pl.BlockSpec((tm, 128), lambda i: (i, 0)),
            compiler_params=cparams,
            cost_estimate=pl.CostEstimate(
                flops=2 * n_pad * n_pad * 2,
                transcendentals=n_pad,
                bytes_accessed=2 * n_pad * n_pad + 4 * n_pad + 256 * n_pad),
        )(a, h2, b2, wl, bl)

    out = slab[:n, 0:1].astype(jnp.float32)   # sigmoid head output
    x2 = slab[:n, 1:3].astype(jnp.float32)    # conv2 output (pre-relu)
    return out, x2


# ---------------------------------------------------------------------------
# Params / reference
# ---------------------------------------------------------------------------
def init_params(key, in_dim):
    k1, k2, k3 = jax.random.split(key, 3)
    scale = 0.2
    return {
        "w1": scale * jax.random.normal(k1, (in_dim, 16), jnp.float32),
        "b1": jnp.zeros((1, 16), jnp.float32),
        "w2": scale * jax.random.normal(k2, (16, 2), jnp.float32),
        "b2": jnp.zeros((1, 2), jnp.float32),
        # torch Linear(2, 1): weight [1, 2] -> stored transposed [2, 1]
        "wl": scale * jax.random.normal(k3, (2, 1), jnp.float32),
        "bl": jnp.zeros((1, 1), jnp.float32),
    }


def gnn_reference(x, edge_index, edge_weight, params):
    """Plain-JAX f32 reference of the PyTorch forward (eval mode)."""
    n = x.shape[0]
    a_hat = build_gcn_adj(edge_index, edge_weight, n, dtype=jnp.float32)
    h = jnp.maximum(a_hat @ (x @ params["w1"]) + params["b1"], 0.0)
    x2 = a_hat @ (h @ params["w2"]) + params["b2"]
    out = jax.nn.sigmoid(jnp.maximum(x2, 0.0) @ params["wl"] + params["bl"])
    return out, x2


# ---------------------------------------------------------------------------
if __name__ == "__main__":
    key = jax.random.PRNGKey(0)
    k_x, k_src, k_dst, k_w, k_p = jax.random.split(key, 5)

    # Small graph; N=300 exercises padded tiles in both paths.
    N, IN_DIM, E = 300, 8, 1500
    x = jax.random.normal(k_x, (N, IN_DIM), jnp.float32)
    edge_index = jnp.stack([
        jax.random.randint(k_src, (E,), 0, N, dtype=jnp.int32),
        jax.random.randint(k_dst, (E,), 0, N, dtype=jnp.int32),
    ])
    edge_weight = jax.random.uniform(k_w, (E,), jnp.float32, 0.1, 1.0)
    params = init_params(k_p, IN_DIM)

    out_r, x2_r = gnn_reference(x, edge_index, edge_weight, params)

    # Fused single-kernel path (A_hat resident in VMEM) — default for small N.
    out, x2 = gnn_forward(x, edge_index, edge_weight, params)
    jax.block_until_ready((out, x2))
    assert out.shape == (N, 1) and x2.shape == (N, 2)
    assert jnp.allclose(out, out_r, atol=5e-2, rtol=5e-2)
    assert jnp.allclose(x2, x2_r, atol=5e-2, rtol=5e-2)

    # Tiled two-pass path (A_hat streamed from HBM) — used for large graphs.
    out_t, x2_t = gnn_forward(x, edge_index, edge_weight, params,
                              force_two_pass=True, tm=128)
    jax.block_until_ready((out_t, x2_t))
    assert out_t.shape == (N, 1) and x2_t.shape == (N, 2)
    assert jnp.allclose(out_t, out_r, atol=5e-2, rtol=5e-2)
    assert jnp.allclose(x2_t, x2_r, atol=5e-2, rtol=5e-2)

    print("KERNEL_OK")
</pallas_src>

<mosaic_0001>
module attributes {stable_mosaic.version = 11 : i64} {
  func.func @fused_kernel(%arg0: memref<304x304xbf16, #tpu.memory_space<vmem>>, %arg1: memref<304x16xbf16, #tpu.memory_space<vmem>>, %arg2: memref<1x16xf32, #tpu.memory_space<vmem>>, %arg3: memref<16x2xbf16, #tpu.memory_space<vmem>>, %arg4: memref<1x2xf32, #tpu.memory_space<vmem>>, %arg5: memref<2xf32, #tpu.memory_space<smem>>, %arg6: memref<1xf32, #tpu.memory_space<smem>>, %arg7: memref<304x128xbf16, #tpu.memory_space<vmem>>) attributes {dimension_semantics = [], scalar_prefetch = 0 : i64, scratch_operands = 0 : i64, tpu.core_type = #tpu.core_type<tc>} {
    %c0 = arith.constant 0 : index
    %c0_0 = arith.constant 0 : index
    %0 = vector.load %arg0[%c0, %c0_0] : memref<304x304xbf16, #tpu.memory_space<vmem>>, vector<304x304xbf16>
    %c0_1 = arith.constant 0 : index
    %c0_2 = arith.constant 0 : index
    %1 = vector.load %arg1[%c0_1, %c0_2] : memref<304x16xbf16, #tpu.memory_space<vmem>>, vector<304x16xbf16>
    %cst = arith.constant dense<0.000000e+00> : vector<304x16xf32>
    %2 = tpu.matmul %0, %1, %cst {dimension_numbers = #tpu.dot_dimension_numbers<[1], [0], [0], [1], [0, 0, 1, 1], [], []>} : vector<304x304xbf16>, vector<304x16xbf16>, vector<304x16xf32> -> vector<304x16xf32>
    %c0_3 = arith.constant 0 : index
    %c0_4 = arith.constant 0 : index
    %3 = vector.load %arg2[%c0_3, %c0_4] : memref<1x16xf32, #tpu.memory_space<vmem>>, vector<1x16xf32>
    %4 = vector.broadcast %3 : vector<1x16xf32> to vector<304x16xf32>
    %5 = arith.addf %2, %4 : vector<304x16xf32>
    %cst_5 = arith.constant 0.000000e+00 : f32
    %6 = vector.broadcast %cst_5 : f32 to vector<304x16xf32>
    %7 = arith.maximumf %5, %6 : vector<304x16xf32>
    %8 = arith.truncf %7 : vector<304x16xf32> to vector<304x16xbf16>
    %c0_6 = arith.constant 0 : index
    %c0_7 = arith.constant 0 : index
    %9 = vector.load %arg3[%c0_6, %c0_7] : memref<16x2xbf16, #tpu.memory_space<vmem>>, vector<16x2xbf16>
    %cst_8 = arith.constant dense<0.000000e+00> : vector<304x2xf32>
    %10 = tpu.matmul %8, %9, %cst_8 {dimension_numbers = #tpu.dot_dimension_numbers<[1], [0], [0], [1], [0, 0, 1, 1], [], []>} : vector<304x16xbf16>, vector<16x2xbf16>, vector<304x2xf32> -> vector<304x2xf32>
    %c0_9 = arith.constant 0 : index
    %c0_10 = arith.constant 0 : index
    %11 = vector.load %arg0[%c0_9, %c0_10] : memref<304x304xbf16, #tpu.memory_space<vmem>>, vector<304x304xbf16>
    %12 = arith.truncf %10 : vector<304x2xf32> to vector<304x2xbf16>
    %cst_11 = arith.constant dense<0.000000e+00> : vector<304x2xf32>
    %13 = tpu.matmul %11, %12, %cst_11 {dimension_numbers = #tpu.dot_dimension_numbers<[1], [0], [0], [1], [0, 0, 1, 1], [], []>} : vector<304x304xbf16>, vector<304x2xbf16>, vector<304x2xf32> -> vector<304x2xf32>
    %c0_12 = arith.constant 0 : index
    %c0_13 = arith.constant 0 : index
    %14 = vector.load %arg4[%c0_12, %c0_13] : memref<1x2xf32, #tpu.memory_space<vmem>>, vector<1x2xf32>
    %15 = vector.broadcast %14 : vector<1x2xf32> to vector<304x2xf32>
    %16 = arith.addf %13, %15 : vector<304x2xf32>
    %cst_14 = arith.constant 0.000000e+00 : f32
    %17 = vector.broadcast %cst_14 : f32 to vector<304x2xf32>
    %18 = arith.maximumf %16, %17 : vector<304x2xf32>
    %19 = vector.extract_strided_slice %18 {offsets = [0, 0], sizes = [304, 1], strides = [1, 1]} : vector<304x2xf32> to vector<304x1xf32>
    %c0_15 = arith.constant 0 : index
    %20 = memref.load %arg5[%c0_15] : memref<2xf32, #tpu.memory_space<smem>>
    %21 = vector.broadcast %20 : f32 to vector<304x1xf32>
    %22 = arith.mulf %19, %21 : vector<304x1xf32>
    %23 = vector.extract_strided_slice %18 {offsets = [0, 1], sizes = [304, 1], strides = [1, 1]} : vector<304x2xf32> to vector<304x1xf32>
    %c1 = arith.constant 1 : index
    %24 = memref.load %arg5[%c1] : memref<2xf32, #tpu.memory_space<smem>>
    %25 = vector.broadcast %24 : f32 to vector<304x1xf32>
    %26 = arith.mulf %23, %25 : vector<304x1xf32>
    %27 = arith.addf %22, %26 : vector<304x1xf32>
    %c0_16 = arith.constant 0 : index
    %28 = memref.load %arg6[%c0_16] : memref<1xf32, #tpu.memory_space<smem>>
    %29 = vector.broadcast %28 : f32 to vector<304x1xf32>
    %30 = arith.addf %27, %29 : vector<304x1xf32>
    %31 = arith.negf %30 : vector<304x1xf32>
    %32 = math.exp %31 : vector<304x1xf32>
    %cst_17 = arith.constant 1.000000e+00 : f32
    %33 = vector.broadcast %cst_17 : f32 to vector<304x1xf32>
    %34 = arith.addf %33, %32 : vector<304x1xf32>
    %35 = arith.divf %33, %34 : vector<304x1xf32>
    %cst_18 = arith.constant 0.000000e+00 : bf16
    %36 = vector.broadcast %cst_18 : bf16 to vector<304x128xbf16>
    %c0_19 = arith.constant 0 : index
    %c0_20 = arith.constant 0 : index
    %37 = vector.load %arg7[%c0_19, %c0_20] : memref<304x128xbf16, #tpu.memory_space<vmem>>, vector<304x128xbf16>
    tpu.vector_store %arg7[%c0_19, %c0_20], %36 {strides = array<i32>} : memref<304x128xbf16, #tpu.memory_space<vmem>>, vector<304x128xbf16>,
    %38 = arith.truncf %35 : vector<304x1xf32> to vector<304x1xbf16>
    %c0_21 = arith.constant 0 : index
    %c0_22 = arith.constant 0 : index
    %39 = vector.load %arg7[%c0_21, %c0_22] : memref<304x128xbf16, #tpu.memory_space<vmem>>, vector<304x1xbf16>
    tpu.vector_store %arg7[%c0_21, %c0_22], %38 {strides = array<i32>} : memref<304x128xbf16, #tpu.memory_space<vmem>>, vector<304x1xbf16>,
    %40 = arith.truncf %16 : vector<304x2xf32> to vector<304x2xbf16>
    %c0_23 = arith.constant 0 : index
    %c1_24 = arith.constant 1 : index
    %41 = vector.load %arg7[%c0_23, %c1_24] : memref<304x128xbf16, #tpu.memory_space<vmem>>, vector<304x2xbf16>
    tpu.vector_store %arg7[%c0_23, %c1_24], %40 {strides = array<i32>} : memref<304x128xbf16, #tpu.memory_space<vmem>>, vector<304x2xbf16>,
    return
  }
}

</mosaic_0001>

<llo_original>
// kernel: tpu_custom_call.1
$region0: #{tpu_custom_call.1}
  #allocation0 [shape = 'u32[]', space=smem, size = 0x4, offset = 0x4, fixed_abs, tag = 'smem constant byte address 0x4 - core index']
  #allocation1 [shape = 'u32[72,128]{1,0:T(1,128)}', space=vmem, size = 0x9000, scoped, tag = 'internal scratch']
  #allocation2 [shape = 'f32[1]{0:T(128)S(6)}', space=smem, size = 0x200, scoped, tag = 'scoped memory for tpu_custom_call.1']
  %s0 = inlined_call_operand.hbm [shape: bf16[304,304], index: 0, kind: input, shape index: {}]
  %s1 = inlined_call_operand.vmem [shape: bf16[304,16], index: 1, kind: input, shape index: {}]
  %s2 = inlined_call_operand.vmem [shape: f32[1,16], index: 2, kind: input, shape index: {}]
  %s3 = inlined_call_operand.vmem [shape: bf16[16,2], index: 3, kind: input, shape index: {}]
  %s4 = inlined_call_operand.vmem [shape: f32[1,2], index: 4, kind: input, shape index: {}]
  %s5 = inlined_call_operand.vmem [shape: f32[2], index: 5, kind: input, shape index: {}]
  %s6 = inlined_call_operand.<no memory space> [shape: f32[1], index: 6, kind: input, shape index: {}]
  %s7 = inlined_call_operand.hbm [shape: bf16[304,128], index: 7, kind: output, shape index: {}]
  %s8 = sld [smem:[#allocation0]]
  $region46: #{tpu_custom_call.1} parent=0
    _
  %s10 = ssub.s32 1, %s8
  %s11 = scalar_select 0, %s10, %s8
  %12 = sst [smem:[#allocation2]] %s6
  $region1: #{tpu_custom_call.1} parent=0
    #allocation3 [shape = 'u8[233472]{0}', space=vmem, size = 0x39000, scoped, tag = 'input window, operand 0, single buffered']
    #allocation4 [shape = 's32[1]{0}', space=sflag, size = 0x4, scoped, tag = 'scoped memory for tpu_custom_call.1']
    #allocation5 [shape = 's32[1]{0}', space=sflag, size = 0x4, scoped, tag = 'scoped memory for tpu_custom_call.1']
    #allocation6 [shape = 's32[1]{0}', space=sflag, size = 0x4, scoped, tag = 'scoped memory for tpu_custom_call.1']
    #allocation7 [shape = 'u8[512]{0}', space=smem, size = 0x200, scoped, tag = 'input window, operand 5, single buffered']
    #allocation8 [shape = 'u8[77824]{0}', space=vmem, size = 0x13000, scoped, tag = 'output window, operand 0, single buffered']
    %13 = vsyncpa [#allocation4], 0
    %14 = vsyncpa [#allocation6], 0
    %15 = vsyncpa [#allocation5], 0
    // Predicated region
    $region2: #{tpu_custom_call.1} parent=1 // pred_check
      _
    $region3: #{tpu_custom_call.1} parent=1 // pred_check_branch
      %17 = sbr.rel (0) target = $region5
    $region4: #{tpu_custom_call.1} parent=1 // pred_region
      %19 = vsyncadd [#allocation4], 0
      %s20 = sshll.u32 %s0, 4
      %s21 = int_to_ptr.hbm [resolvable:$true] %s20
      %s22 = sshll.u32 [#allocation3], 4
      %s23 = int_to_ptr.vmem [resolvable:$true] %s22
      %28 = dma.hbm_to_vmem [thread:$0]  %s21, 7296, %s23, [#allocation4], 192, 192, 12
    $region5: #{tpu_custom_call.1} parent=1 // pred_fallthru
      _
    // Predicated region
    $region6: #{tpu_custom_call.1} parent=1 // pred_check
      _
    $region7: #{tpu_custom_call.1} parent=1 // pred_check_branch
      %30 = sbr.rel (0) target = $region9
    $region8: #{tpu_custom_call.1} parent=1 // pred_region
      _
    $region9: #{tpu_custom_call.1} parent=1 // pred_fallthru
      _
    // Predicated region
    $region10: #{tpu_custom_call.1} parent=1 // pred_check
      _
    $region11: #{tpu_custom_call.1} parent=1 // pred_check_branch
      %32 = sbr.rel (0) target = $region13
    $region12: #{tpu_custom_call.1} parent=1 // pred_region
      _
    $region13: #{tpu_custom_call.1} parent=1 // pred_fallthru
      _
    // Predicated region
    $region14: #{tpu_custom_call.1} parent=1 // pred_check
      _
    $region15: #{tpu_custom_call.1} parent=1 // pred_check_branch
      %34 = sbr.rel (0) target = $region17
    $region16: #{tpu_custom_call.1} parent=1 // pred_region
      _
    $region17: #{tpu_custom_call.1} parent=1 // pred_fallthru
      _
    // Predicated region
    $region18: #{tpu_custom_call.1} parent=1 // pred_check
      _
    $region19: #{tpu_custom_call.1} parent=1 // pred_check_branch
      %36 = sbr.rel (0) target = $region21
    $region20: #{tpu_custom_call.1} parent=1 // pred_region
      _
    $region21: #{tpu_custom_call.1} parent=1 // pred_fallthru
      _
    // Predicated region
    $region22: #{tpu_custom_call.1} parent=1 // pred_check
      _
    $region23: #{tpu_custom_call.1} parent=1 // pred_check_branch
      %38 = sbr.rel (0) target = $region25
    $region24: #{tpu_custom_call.1} parent=1 // pred_region
      %40 = vsyncadd [#allocation6], 0
      %s42 = sshll.u32 %s5, 4
      %s43 = int_to_ptr.vmem [resolvable:$true] %s42
      %45 = dma.vmem_to_smem %s43, 16, [#allocation7], [#allocation6]
    $region25: #{tpu_custom_call.1} parent=1 // pred_fallthru
      _
    // Predicated region
    $region26: #{tpu_custom_call.1} parent=1 // pred_check
      _
    $region27: #{tpu_custom_call.1} parent=1 // pred_check_branch
      %47 = sbr.rel (0) target = $region29
    $region28: #{tpu_custom_call.1} parent=1 // pred_region
      _
    $region29: #{tpu_custom_call.1} parent=1 // pred_fallthru
      _
    // Predicated region
    $region30: #{tpu_custom_call.1} parent=1 // pred_check
      _
    $region31: #{tpu_custom_call.1} parent=1 // pred_check_branch
      %49 = sbr.rel (0) target = $region33
    $region32: #{tpu_custom_call.1} parent=1 // pred_region
      %51 = dma.done [#allocation4], 7296
    $region33: #{tpu_custom_call.1} parent=1 // pred_fallthru
      _
    // Predicated region
    $region34: #{tpu_custom_call.1} parent=1 // pred_check
      _
    $region35: #{tpu_custom_call.1} parent=1 // pred_check_branch
      %53 = sbr.rel (0) target = $region37
    $region36: #{tpu_custom_call.1} parent=1 // pred_region
      %55 = dma.done [#allocation6], 16
    $region37: #{tpu_custom_call.1} parent=1 // pred_fallthru
      _
    %56 = sfence
    %v58 = vld [vmem:[#allocation3] sm:$0xff]
    %v59 = vld [vmem:[#allocation3 + $0x8] sm:$0xf]
    %v60 = vld [vmem:[#allocation3 + $0xc] sm:$0xff]
    %v61 = vld [vmem:[#allocation3 + $0x14] sm:$0xf]
    %v62 = vld [vmem:[#allocation3 + $0x18] sm:$0xff]
    %v63 = vld [vmem:[#allocation3 + $0x20] sm:$0xf]
    %v64 = vld [vmem:[#allocation3 + $0x24] sm:$0xff]
    %v65 = vld [vmem:[#allocation3 + $0x2c] sm:$0xf]
    %v66 = vld [vmem:[#allocation3 + $0x30] sm:$0xff]
    %v67 = vld [vmem:[#allocation3 + $0x38] sm:$0xf]
    %v68 = vld [vmem:[#allocation3 + $0x3c] sm:$0xff]
    %v69 = vld [vmem:[#allocation3 + $0x44] sm:$0xf]
    %v70 = vld [vmem:[#allocation3 + $0x48] sm:$0xff]
    %v71 = vld [vmem:[#allocation3 + $0x50] sm:$0xf]
    %v72 = vld [vmem:[#allocation3 + $0x54] sm:$0xff]
    %v73 = vld [vmem:[#allocation3 + $0x5c] sm:$0xf]
    %v74 = vld [vmem:[#allocation3 + $0x60] sm:$0xff]
    %v75 = vld [vmem:[#allocation3 + $0x68] sm:$0xf]
    %v76 = vld [vmem:[#allocation3 + $0x6c] sm:$0xff]
    %v77 = vld [vmem:[#allocation3 + $0x74] sm:$0xf]
    %v78 = vld [vmem:[#allocation3 + $0x78] sm:$0xff]
    %v79 = vld [vmem:[#allocation3 + $0x80] sm:$0xf]
    %v80 = vld [vmem:[#allocation3 + $0x84] sm:$0xff]
    %v81 = vld [vmem:[#allocation3 + $0x8c] sm:$0xf]
    %v82 = vld [vmem:[#allocation3 + $0x90] sm:$0xff]
    %v83 = vld [vmem:[#allocation3 + $0x98] sm:$0xf]
    %v84 = vld [vmem:[#allocation3 + $0x9c] sm:$0xff]
    %v85 = vld [vmem:[#allocation3 + $0xa4] sm:$0xf]
    %v86 = vld [vmem:[#allocation3 + $0xa8] sm:$0xff]
    %v87 = vld [vmem:[#allocation3 + $0xb0] sm:$0xf]
    %v88 = vld [vmem:[#allocation3 + $0xb4] sm:$0xff]
    %v89 = vld [vmem:[#allocation3 + $0xbc] sm:$0xf]
    %v90 = vld [vmem:[#allocation3 + $0xc0] sm:$0xff]
    %v91 = vld [vmem:[#allocation3 + $0xc8] sm:$0xf]
    %v92 = vld [vmem:[#allocation3 + $0xcc] sm:$0xff]
    %v93 = vld [vmem:[#allocation3 + $0xd4] sm:$0xf]
    %v94 = vld [vmem:[#allocation3 + $0xd8] sm:$0xff]
    %v95 = vld [vmem:[#allocation3 + $0xe0] sm:$0xf]
    %v96 = vld [vmem:[#allocation3 + $0xe4] sm:$0xff]
    %v97 = vld [vmem:[#allocation3 + $0xec] sm:$0xf]
    %v98 = vld [vmem:[#allocation3 + $0xf0] sm:$0xff]
    %v99 = vld [vmem:[#allocation3 + $0xf8] sm:$0xf]
    %v100 = vld [vmem:[#allocation3 + $0xfc] sm:$0xff]
    %v101 = vld [vmem:[#allocation3 + $0x104] sm:$0xf]
    %v102 = vld [vmem:[#allocation3 + $0x108] sm:$0xff]
    %v103 = vld [vmem:[#allocation3 + $0x110] sm:$0xf]
    %v104 = vld [vmem:[#allocation3 + $0x114] sm:$0xff]
    %v105 = vld [vmem:[#allocation3 + $0x11c] sm:$0xf]
    %v106 = vld [vmem:[#allocation3 + $0x120] sm:$0xff]
    %v107 = vld [vmem:[#allocation3 + $0x128] sm:$0xf]
    %v108 = vld [vmem:[#allocation3 + $0x12c] sm:$0xff]
    %v109 = vld [vmem:[#allocation3 + $0x134] sm:$0xf]
    %v110 = vld [vmem:[#allocation3 + $0x138] sm:$0xff]
    %v111 = vld [vmem:[#allocation3 + $0x140] sm:$0xf]
    %v112 = vld [vmem:[#allocation3 + $0x144] sm:$0xff]
    %v113 = vld [vmem:[#allocation3 + $0x14c] sm:$0xf]
    %v114 = vld [vmem:[#allocation3 + $0x150] sm:$0xff]
    %v115 = vld [vmem:[#allocation3 + $0x158] sm:$0xf]
    %v116 = vld [vmem:[#allocation3 + $0x15c] sm:$0xff]
    %v117 = vld [vmem:[#allocation3 + $0x164] sm:$0xf]
    %v118 = vld [vmem:[#allocation3 + $0x168] sm:$0xff]
    %v119 = vld [vmem:[#allocation3 + $0x170] sm:$0xf]
    %v120 = vld [vmem:[#allocation3 + $0x174] sm:$0xff]
    %v121 = vld [vmem:[#allocation3 + $0x17c] sm:$0xf]
    %v122 = vld [vmem:[#allocation3 + $0x180] sm:$0xff]
    %v123 = vld [vmem:[#allocation3 + $0x188] sm:$0xf]
    %v124 = vld [vmem:[#allocation3 + $0x18c] sm:$0xff]
    %v125 = vld [vmem:[#allocation3 + $0x194] sm:$0xf]
    %v126 = vld [vmem:[#allocation3 + $0x198] sm:$0xff]
    %v127 = vld [vmem:[#allocation3 + $0x1a0] sm:$0xf]
    %v128 = vld [vmem:[#allocation3 + $0x1a4] sm:$0xff]
    %v129 = vld [vmem:[#allocation3 + $0x1ac] sm:$0xf]
    %v130 = vld [vmem:[#allocation3 + $0x1b0] sm:$0xff]
    %v131 = vld [vmem:[#allocation3 + $0x1b8] sm:$0xf]
    %v132 = vld [vmem:[#allocation3 + $0x1bc] sm:$0xff]
    %v133 = vld [vmem:[#allocation3 + $0x1c4] sm:$0xf]
    %v134 = vld [vmem:[%s1] sm:$0xf]
    %v135 = vld [vmem:[%s1 + $0x4] sm:$0xf]
    %v136 = vld [vmem:[%s1 + $0x8] sm:$0xf]
    %v137 = vld [vmem:[%s1 + $0xc] sm:$0xf]
    %v138 = vld [vmem:[%s1 + $0x10] sm:$0xf]
    %v139 = vld [vmem:[%s1 + $0x14] sm:$0xf]
    %v140 = vld [vmem:[%s1 + $0x18] sm:$0xf]
    %v141 = vld [vmem:[%s1 + $0x1c] sm:$0xf]
    %v142 = vld [vmem:[%s1 + $0x20] sm:$0xf]
    %v143 = vld [vmem:[%s1 + $0x24] sm:$0xf]
    %v144 = vld [vmem:[%s1 + $0x28] sm:$0xf]
    %v145 = vld [vmem:[%s1 + $0x2c] sm:$0xf]
    %v146 = vld [vmem:[%s1 + $0x30] sm:$0xf]
    %v147 = vld [vmem:[%s1 + $0x34] sm:$0xf]
    %v148 = vld [vmem:[%s1 + $0x38] sm:$0xf]
    %v149 = vld [vmem:[%s1 + $0x3c] sm:$0xf]
    %v150 = vld [vmem:[%s1 + $0x40] sm:$0xf]
    %v151 = vld [vmem:[%s1 + $0x44] sm:$0xf]
    %v152 = vld [vmem:[%s1 + $0x48] sm:$0xf]
    %v153 = vld [vmem:[%s1 + $0x4c] sm:$0xf]
    %v154 = vld [vmem:[%s1 + $0x50] sm:$0xf]
    %v155 = vld [vmem:[%s1 + $0x54] sm:$0xf]
    %v156 = vld [vmem:[%s1 + $0x58] sm:$0xf]
    %v157 = vld [vmem:[%s1 + $0x5c] sm:$0xf]
    %v158 = vld [vmem:[%s1 + $0x60] sm:$0xf]
    %v159 = vld [vmem:[%s1 + $0x64] sm:$0xf]
    %v160 = vld [vmem:[%s1 + $0x68] sm:$0xf]
    %v161 = vld [vmem:[%s1 + $0x6c] sm:$0xf]
    %v162 = vld [vmem:[%s1 + $0x70] sm:$0xf]
    %v163 = vld [vmem:[%s1 + $0x74] sm:$0xf]
    %v164 = vld [vmem:[%s1 + $0x78] sm:$0xf]
    %v165 = vld [vmem:[%s1 + $0x7c] sm:$0xf]
    %v166 = vld [vmem:[%s1 + $0x80] sm:$0xf]
    %v167 = vld [vmem:[%s1 + $0x84] sm:$0xf]
    %v168 = vld [vmem:[%s1 + $0x88] sm:$0xf]
    %v169 = vld [vmem:[%s1 + $0x8c] sm:$0xf]
    %v170 = vld [vmem:[%s1 + $0x90] sm:$0xf]
    %v171 = vld [vmem:[%s1 + $0x94] sm:$0xf]
    %v172 = vld [vmem:[%s2] sm:$0x1]
    %v174 = vperm.slane %v172, 0
    %v252 = vunpack.c.l.b16 %v58
    %v253 = vunpack.c.h.b16 %v58
    %v254 = vunpack.c.l.b16 %v59
    %v255 = vunpack.c.l.b16 %v60
    %v256 = vunpack.c.h.b16 %v60
    %v257 = vunpack.c.l.b16 %v61
    %v258 = vunpack.c.l.b16 %v62
    %v259 = vunpack.c.h.b16 %v62
    %v260 = vunpack.c.l.b16 %v63
    %v261 = vunpack.c.l.b16 %v64
    %v262 = vunpack.c.h.b16 %v64
    %v263 = vunpack.c.l.b16 %v65
    %v264 = vunpack.c.l.b16 %v66
    %v265 = vunpack.c.h.b16 %v66
    %v266 = vunpack.c.l.b16 %v67
    %v267 = vunpack.c.l.b16 %v68
    %v268 = vunpack.c.h.b16 %v68
    %v269 = vunpack.c.l.b16 %v69
    %v270 = vunpack.c.l.b16 %v70
    %v271 = vunpack.c.h.b16 %v70
    %v272 = vunpack.c.l.b16 %v71
    %v273 = vunpack.c.l.b16 %v72
    %v274 = vunpack.c.h.b16 %v72
    %v275 = vunpack.c.l.b16 %v73
    %v276 = vunpack.c.l.b16 %v74
    %v277 = vunpack.c.h.b16 %v74
    %v278 = vunpack.c.l.b16 %v75
    %v279 = vunpack.c.l.b16 %v76
    %v280 = vunpack.c.h.b16 %v76
    %v281 = vunpack.c.l.b16 %v77
    %v282 = vunpack.c.l.b16 %v78
    %v283 = vunpack.c.h.b16 %v78
    %v284 = vunpack.c.l.b16 %v79
    %v285 = vunpack.c.l.b16 %v80
    %v286 = vunpack.c.h.b16 %v80
    %v287 = vunpack.c.l.b16 %v81
    %v288 = vunpack.c.l.b16 %v82
    %v289 = vunpack.c.h.b16 %v82
    %v290 = vunpack.c.l.b16 %v83
    %v291 = vunpack.c.l.b16 %v84
    %v292 = vunpack.c.h.b16 %v84
    %v293 = vunpack.c.l.b16 %v85
    %v294 = vunpack.c.l.b16 %v86
    %v295 = vunpack.c.h.b16 %v86
    %v296 = vunpack.c.l.b16 %v87
    %v297 = vunpack.c.l.b16 %v88
    %v298 = vunpack.c.h.b16 %v88
    %v299 = vunpack.c.l.b16 %v89
    %v300 = vunpack.c.l.b16 %v90
    %v301 = vunpack.c.h.b16 %v90
    %v302 = vunpack.c.l.b16 %v91
    %v303 = vunpack.c.l.b16 %v92
    %v304 = vunpack.c.h.b16 %v92
    %v305 = vunpack.c.l.b16 %v93
    %v306 = vunpack.c.l.b16 %v94
    %v307 = vunpack.c.h.b16 %v94
    %v308 = vunpack.c.l.b16 %v95
    %v309 = vunpack.c.l.b16 %v96
    %v310 = vunpack.c.h.b16 %v96
    %v311 = vunpack.c.l.b16 %v97
    %v312 = vunpack.c.l.b16 %v98
    %v313 = vunpack.c.h.b16 %v98
    %v314 = vunpack.c.l.b16 %v99
    %v315 = vunpack.c.l.b16 %v100
    %v316 = vunpack.c.h.b16 %v100
    %v317 = vunpack.c.l.b16 %v101
    %v318 = vunpack.c.l.b16 %v102
    %v319 = vunpack.c.h.b16 %v102
    %v320 = vunpack.c.l.b16 %v103
    %v321 = vunpack.c.l.b16 %v104
    %v322 = vunpack.c.h.b16 %v104
    %v323 = vunpack.c.l.b16 %v105
    %v324 = vunpack.c.l.b16 %v106
    %v325 = vunpack.c.h.b16 %v106
    %v326 = vunpack.c.l.b16 %v107
    %v327 = vunpack.c.l.b16 %v108
    %v328 = vunpack.c.h.b16 %v108
    %v329 = vunpack.c.l.b16 %v109
    %v330 = vunpack.c.l.b16 %v110
    %v331 = vunpack.c.h.b16 %v110
    %v332 = vunpack.c.l.b16 %v111
    %v333 = vunpack.c.l.b16 %v112
    %v334 = vunpack.c.h.b16 %v112
    %v335 = vunpack.c.l.b16 %v113
    %v336 = vunpack.c.l.b16 %v114
    %v337 = vunpack.c.h.b16 %v114
    %v338 = vunpack.c.l.b16 %v115
    %v339 = vunpack.c.l.b16 %v116
    %v340 = vunpack.c.h.b16 %v116
    %v341 = vunpack.c.l.b16 %v117
    %v342 = vunpack.c.l.b16 %v118
    %v343 = vunpack.c.h.b16 %v118
    %v344 = vunpack.c.l.b16 %v119
    %v345 = vunpack.c.l.b16 %v120
    %v346 = vunpack.c.h.b16 %v120
    %v347 = vunpack.c.l.b16 %v121
    %v348 = vunpack.c.l.b16 %v122
    %v349 = vunpack.c.h.b16 %v122
    %v350 = vunpack.c.l.b16 %v123
    %v351 = vunpack.c.l.b16 %v124
    %v352 = vunpack.c.h.b16 %v124
    %v353 = vunpack.c.l.b16 %v125
    %v354 = vunpack.c.l.b16 %v126
    %v355 = vunpack.c.h.b16 %v126
    %v356 = vunpack.c.l.b16 %v127
    %v357 = vunpack.c.l.b16 %v128
    %v358 = vunpack.c.h.b16 %v128
    %v359 = vunpack.c.l.b16 %v129
    %v360 = vunpack.c.l.b16 %v130
    %v361 = vunpack.c.h.b16 %v130
    %v362 = vunpack.c.l.b16 %v131
    %v363 = vunpack.c.l.b16 %v132
    %v364 = vunpack.c.h.b16 %v132
    %v365 = vunpack.c.l.b16 %v133
    %v366 = vpack.c.b16 %v255, %v252
    %v367 = vpack.c.b16 %v256, %v253
    %v368 = vpack.c.b16 %v257, %v254
    %v369 = vpack.c.b16 %v261, %v258
    %v370 = vpack.c.b16 %v262, %v259
    %v371 = vpack.c.b16 %v263, %v260
    %v372 = vpack.c.b16 %v267, %v264
    %v373 = vpack.c.b16 %v268, %v265
    %v374 = vpack.c.b16 %v269, %v266
    %v375 = vpack.c.b16 %v273, %v270
    %v376 = vpack.c.b16 %v274, %v271
    %v377 = vpack.c.b16 %v275, %v272
    %v378 = vpack.c.b16 %v279, %v276
    %v379 = vpack.c.b16 %v280, %v277
    %v380 = vpack.c.b16 %v281, %v278
    %v381 = vpack.c.b16 %v285, %v282
    %v382 = vpack.c.b16 %v286, %v283
    %v383 = vpack.c.b16 %v287, %v284
    %v384 = vpack.c.b16 %v291, %v288
    %v385 = vpack.c.b16 %v292, %v289
    %v386 = vpack.c.b16 %v293, %v290
    %v387 = vpack.c.b16 %v297, %v294
    %v388 = vpack.c.b16 %v298, %v295
    %v389 = vpack.c.b16 %v299, %v296
    %v390 = vpack.c.b16 %v303, %v300
    %v391 = vpack.c.b16 %v304, %v301
    %v392 = vpack.c.b16 %v305, %v302
    %v393 = vpack.c.b16 %v309, %v306
    %v394 = vpack.c.b16 %v310, %v307
    %v395 = vpack.c.b16 %v311, %v308
    %v396 = vpack.c.b16 %v315, %v312
    %v397 = vpack.c.b16 %v316, %v313
    %v398 = vpack.c.b16 %v317, %v314
    %v399 = vpack.c.b16 %v321, %v318
    %v400 = vpack.c.b16 %v322, %v319
    %v401 = vpack.c.b16 %v323, %v320
    %v402 = vpack.c.b16 %v327, %v324
    %v403 = vpack.c.b16 %v328, %v325
    %v404 = vpack.c.b16 %v329, %v326
    %v405 = vpack.c.b16 %v333, %v330
    %v406 = vpack.c.b16 %v334, %v331
    %v407 = vpack.c.b16 %v335, %v332
    %v408 = vpack.c.b16 %v339, %v336
    %v409 = vpack.c.b16 %v340, %v337
    %v410 = vpack.c.b16 %v341, %v338
    %v411 = vpack.c.b16 %v345, %v342
    %v412 = vpack.c.b16 %v346, %v343
    %v413 = vpack.c.b16 %v347, %v344
    %v414 = vpack.c.b16 %v351, %v348
    %v415 = vpack.c.b16 %v352, %v349
    %v416 = vpack.c.b16 %v353, %v350
    %v417 = vpack.c.b16 %v357, %v354
    %v418 = vpack.c.b16 %v358, %v355
    %v419 = vpack.c.b16 %v359, %v356
    %v420 = vpack.c.b16 %v363, %v360
    %v421 = vpack.c.b16 %v364, %v361
    %v422 = vpack.c.b16 %v365, %v362
    %v499 = vunpack.c.l.b16 %v134
    %v500 = vunpack.c.l.b16 %v135
    %v501 = vunpack.c.l.b16 %v136
    %v502 = vunpack.c.l.b16 %v137
    %v503 = vunpack.c.l.b16 %v138
    %v504 = vunpack.c.l.b16 %v139
    %v505 = vunpack.c.l.b16 %v140
    %v506 = vunpack.c.l.b16 %v141
    %v507 = vunpack.c.l.b16 %v142
    %v508 = vunpack.c.l.b16 %v143
    %v509 = vunpack.c.l.b16 %v144
    %v510 = vunpack.c.l.b16 %v145
    %v511 = vunpack.c.l.b16 %v146
    %v512 = vunpack.c.l.b16 %v147
    %v513 = vunpack.c.l.b16 %v148
    %v514 = vunpack.c.l.b16 %v149
    %v515 = vunpack.c.l.b16 %v150
    %v516 = vunpack.c.l.b16 %v151
    %v517 = vunpack.c.l.b16 %v152
    %v518 = vunpack.c.l.b16 %v153
    %v519 = vunpack.c.l.b16 %v154
    %v520 = vunpack.c.l.b16 %v155
    %v521 = vunpack.c.l.b16 %v156
    %v522 = vunpack.c.l.b16 %v157
    %v523 = vunpack.c.l.b16 %v158
    %v524 = vunpack.c.l.b16 %v159
    %v525 = vunpack.c.l.b16 %v160
    %v526 = vunpack.c.l.b16 %v161
    %v527 = vunpack.c.l.b16 %v162
    %v528 = vunpack.c.l.b16 %v163
    %v529 = vunpack.c.l.b16 %v164
    %v530 = vunpack.c.l.b16 %v165
    %v531 = vunpack.c.l.b16 %v166
    %v532 = vunpack.c.l.b16 %v167
    %v533 = vunpack.c.l.b16 %v168
    %v534 = vunpack.c.l.b16 %v169
    %v535 = vunpack.c.l.b16 %v170
    %v536 = vunpack.c.l.b16 %v171
    %v537 = vpack.c.b16 %v500, %v499
    %v538 = vpack.c.b16 %v502, %v501
    %v539 = vpack.c.b16 %v504, %v503
    %v540 = vpack.c.b16 %v506, %v505
    %v541 = vpack.c.b16 %v508, %v507
    %v542 = vpack.c.b16 %v510, %v509
    %v543 = vpack.c.b16 %v512, %v511
    %v544 = vpack.c.b16 %v514, %v513
    %v545 = vpack.c.b16 %v516, %v515
    %v546 = vpack.c.b16 %v518, %v517
    %v547 = vpack.c.b16 %v520, %v519
    %v548 = vpack.c.b16 %v522, %v521
    %v549 = vpack.c.b16 %v524, %v523
    %v550 = vpack.c.b16 %v526, %v525
    %v551 = vpack.c.b16 %v528, %v527
    %v552 = vpack.c.b16 %v530, %v529
    %v553 = vpack.c.b16 %v532, %v531
    %v554 = vpack.c.b16 %v534, %v533
    %v555 = vpack.c.b16 %v536, %v535
    %vm575 = vcmask 392192
    %v577 = vsel %vm575, %v368, 0
    %v580 = vsel %vm575, %v371, 0
    %v583 = vsel %vm575, %v374, 0
    %v586 = vsel %vm575, %v377, 0
    %v589 = vsel %vm575, %v380, 0
    %v592 = vsel %vm575, %v383, 0
    %v595 = vsel %vm575, %v386, 0
    %v598 = vsel %vm575, %v389, 0
    %v601 = vsel %vm575, %v392, 0
    %v604 = vsel %vm575, %v395, 0
    %v607 = vsel %vm575, %v398, 0
    %v610 = vsel %vm575, %v401, 0
    %v613 = vsel %vm575, %v404, 0
    %v616 = vsel %vm575, %v407, 0
    %v619 = vsel %vm575, %v410, 0
    %v622 = vsel %vm575, %v413, 0
    %v625 = vsel %vm575, %v416, 0
    %v628 = vsel %vm575, %v419, 0
    %v631 = vsel %vm575, %v422, 0
    %633 = vmatpush.bf16.msra.mxu0 %v544
    %634 = vmatpush.bf16.msra.mxu0 %v543
    %635 = vmatpush.bf16.msra.mxu0 %v542
    %636 = vmatpush.bf16.msra.mxu0 %v541
    %637 = vmatpush.bf16.msra.mxu0 %v540
    %638 = vmatpush.bf16.msra.mxu0 %v539
    %639 = vmatpush.bf16.msra.mxu0 %v538
    %640 = vmatpush.bf16.msra.mxu0 %v537
    %641 = vmatmul.bf16.gmra.mxu0 %v366
    %v642 = vpop.f32.mrf.mxu0
    %v643 = vadd.f32 %v174, %v642
    %v644 = vpop.f32.mrf.mxu0
    %v645 = vadd.f32 %v174, %v644
    %646 = vmatmul.bf16.gmra.mxu0 %v369
    %v647 = vpop.f32.mrf.mxu0
    %v648 = vadd.f32 %v174, %v647
    %v649 = vpop.f32.mrf.mxu0
    %v650 = vadd.f32 %v174, %v649
    %651 = vmatmul.bf16.gmra.mxu0 %v372
    %v652 = vpop.f32.mrf.mxu0
    %v653 = vadd.f32 %v174, %v652
    %v654 = vpop.f32.mrf.mxu0
    %v655 = vadd.f32 %v174, %v654
    %656 = vmatmul.bf16.gmra.mxu0 %v375
    %v657 = vpop.f32.mrf.mxu0
    %v658 = vadd.f32 %v174, %v657
    %v659 = vpop.f32.mrf.mxu0
    %v660 = vadd.f32 %v174, %v659
    %661 = vmatmul.bf16.gmra.mxu0 %v378
    %v662 = vpop.f32.mrf.mxu0
    %v663 = vadd.f32 %v174, %v662
    %v664 = vpop.f32.mrf.mxu0
    %v665 = vadd.f32 %v174, %v664
    %666 = vmatmul.bf16.gmra.mxu0 %v381
    %v667 = vpop.f32.mrf.mxu0
    %v668 = vadd.f32 %v174, %v667
    %v669 = vpop.f32.mrf.mxu0
    %v670 = vadd.f32 %v174, %v669
    %671 = vmatmul.bf16.gmra.mxu0 %v384
    %v672 = vpop.f32.mrf.mxu0
    %v673 = vadd.f32 %v174, %v672
    %v674 = vpop.f32.mrf.mxu0
    %v675 = vadd.f32 %v174, %v674
    %676 = vmatmul.bf16.gmra.mxu0 %v387
    %v677 = vpop.f32.mrf.mxu0
    %v678 = vadd.f32 %v174, %v677
    %v679 = vpop.f32.mrf.mxu0
    %v680 = vadd.f32 %v174, %v679
    %681 = vmatmul.bf16.gmra.mxu0 %v390
    %v682 = vpop.f32.mrf.mxu0
    %v683 = vadd.f32 %v174, %v682
    %v684 = vpop.f32.mrf.mxu0
    %v685 = vadd.f32 %v174, %v684
    %686 = vmatmul.bf16.gmra.mxu0 %v393
    %v687 = vpop.f32.mrf.mxu0
    %v688 = vadd.f32 %v174, %v687
    %v689 = vpop.f32.mrf.mxu0
    %v690 = vadd.f32 %v174, %v689
    %691 = vmatmul.bf16.gmra.mxu0 %v396
    %v692 = vpop.f32.mrf.mxu0
    %v693 = vadd.f32 %v174, %v692
    %v694 = vpop.f32.mrf.mxu0
    %v695 = vadd.f32 %v174, %v694
    %696 = vmatmul.bf16.gmra.mxu0 %v399
    %v697 = vpop.f32.mrf.mxu0
    %v698 = vadd.f32 %v174, %v697
    %v699 = vpop.f32.mrf.mxu0
    %v700 = vadd.f32 %v174, %v699
    %701 = vmatmul.bf16.gmra.mxu0 %v402
    %v702 = vpop.f32.mrf.mxu0
    %v703 = vadd.f32 %v174, %v702
    %v704 = vpop.f32.mrf.mxu0
    %v705 = vadd.f32 %v174, %v704
    %706 = vmatmul.bf16.gmra.mxu0 %v405
    %v707 = vpop.f32.mrf.mxu0
    %v708 = vadd.f32 %v174, %v707
    %v709 = vpop.f32.mrf.mxu0
    %v710 = vadd.f32 %v174, %v709
    %711 = vmatmul.bf16.gmra.mxu0 %v408
    %v712 = vpop.f32.mrf.mxu0
    %v713 = vadd.f32 %v174, %v712
    %v714 = vpop.f32.mrf.mxu0
    %v715 = vadd.f32 %v174, %v714
    %716 = vmatmul.bf16.gmra.mxu0 %v411
    %v717 = vpop.f32.mrf.mxu0
    %v718 = vadd.f32 %v174, %v717
    %v719 = vpop.f32.mrf.mxu0
    %v720 = vadd.f32 %v174, %v719
    %721 = vmatmul.bf16.gmra.mxu0 %v414
    %v722 = vpop.f32.mrf.mxu0
    %v723 = vadd.f32 %v174, %v722
    %v724 = vpop.f32.mrf.mxu0
    %v725 = vadd.f32 %v174, %v724
    %726 = vmatmul.bf16.gmra.mxu0 %v417
    %v727 = vpop.f32.mrf.mxu0
    %v728 = vadd.f32 %v174, %v727
    %v729 = vpop.f32.mrf.mxu0
    %v730 = vadd.f32 %v174, %v729
    %731 = vmatmul.bf16.gmra.mxu0 %v420
    %v732 = vpop.f32.mrf.mxu0
    %v733 = vadd.f32 %v174, %v732
    %v734 = vpop.f32.mrf.mxu0
    %v735 = vadd.f32 %v174, %v734
    %736 = vdwg.mxu0
    %737 = vmatpush.bf16.msra.mxu0 %v552
    %738 = vmatpush.bf16.msra.mxu0 %v551
    %739 = vmatpush.bf16.msra.mxu0 %v550
    %740 = vmatpush.bf16.msra.mxu0 %v549
    %741 = vmatpush.bf16.msra.mxu0 %v548
    %742 = vmatpush.bf16.msra.mxu0 %v547
    %743 = vmatpush.bf16.msra.mxu0 %v546
    %744 = vmatpush.bf16.msra.mxu0 %v545
    %745 = vmatmul.bf16.gmra.mxu0 %v367
    %v746 = vpop.f32.mrf.mxu0
    %v747 = vadd.f32 %v643, %v746
    %v748 = vpop.f32.mrf.mxu0
    %v749 = vadd.f32 %v645, %v748
    %750 = vmatmul.bf16.gmra.mxu0 %v370
    %v751 = vpop.f32.mrf.mxu0
    %v752 = vadd.f32 %v648, %v751
    %v753 = vpop.f32.mrf.mxu0
    %v754 = vadd.f32 %v650, %v753
    %755 = vmatmul.bf16.gmra.mxu0 %v373
    %v756 = vpop.f32.mrf.mxu0
    %v757 = vadd.f32 %v653, %v756
    %v758 = vpop.f32.mrf.mxu0
    %v759 = vadd.f32 %v655, %v758
    %760 = vmatmul.bf16.gmra.mxu0 %v376
    %v761 = vpop.f32.mrf.mxu0
    %v762 = vadd.f32 %v658, %v761
    %v763 = vpop.f32.mrf.mxu0
    %v764 = vadd.f32 %v660, %v763
    %765 = vmatmul.bf16.gmra.mxu0 %v379
    %v766 = vpop.f32.mrf.mxu0
    %v767 = vadd.f32 %v663, %v766
    %v768 = vpop.f32.mrf.mxu0
    %v769 = vadd.f32 %v665, %v768
    %770 = vmatmul.bf16.gmra.mxu0 %v382
    %v771 = vpop.f32.mrf.mxu0
    %v772 = vadd.f32 %v668, %v771
    %v773 = vpop.f32.mrf.mxu0
    %v774 = vadd.f32 %v670, %v773
    %775 = vmatmul.bf16.gmra.mxu0 %v385
    %v776 = vpop.f32.mrf.mxu0
    %v777 = vadd.f32 %v673, %v776
    %v778 = vpop.f32.mrf.mxu0
    %v779 = vadd.f32 %v675, %v778
    %780 = vmatmul.bf16.gmra.mxu0 %v388
    %v781 = vpop.f32.mrf.mxu0
    %v782 = vadd.f32 %v678, %v781
    %v783 = vpop.f32.mrf.mxu0
    %v784 = vadd.f32 %v680, %v783
    %785 = vmatmul.bf16.gmra.mxu0 %v391
    %v786 = vpop.f32.mrf.mxu0
    %v787 = vadd.f32 %v683, %v786
    %v788 = vpop.f32.mrf.mxu0
    %v789 = vadd.f32 %v685, %v788
    %790 = vmatmul.bf16.gmra.mxu0 %v394
    %v791 = vpop.f32.mrf.mxu0
    %v792 = vadd.f32 %v688, %v791
    %v793 = vpop.f32.mrf.mxu0
    %v794 = vadd.f32 %v690, %v793
    %795 = vmatmul.bf16.gmra.mxu0 %v397
    %v796 = vpop.f32.mrf.mxu0
    %v797 = vadd.f32 %v693, %v796
    %v798 = vpop.f32.mrf.mxu0
    %v799 = vadd.f32 %v695, %v798
    %800 = vmatmul.bf16.gmra.mxu0 %v400
    %v801 = vpop.f32.mrf.mxu0
    %v802 = vadd.f32 %v698, %v801
    %v803 = vpop.f32.mrf.mxu0
    %v804 = vadd.f32 %v700, %v803
    %805 = vmatmul.bf16.gmra.mxu0 %v403
    %v806 = vpop.f32.mrf.mxu0
    %v807 = vadd.f32 %v703, %v806
    %v808 = vpop.f32.mrf.mxu0
    %v809 = vadd.f32 %v705, %v808
    %810 = vmatmul.bf16.gmra.mxu0 %v406
    %v811 = vpop.f32.mrf.mxu0
    %v812 = vadd.f32 %v708, %v811
    %v813 = vpop.f32.mrf.mxu0
    %v814 = vadd.f32 %v710, %v813
    %815 = vmatmul.bf16.gmra.mxu0 %v409
    %v816 = vpop.f32.mrf.mxu0
    %v817 = vadd.f32 %v713, %v816
    %v818 = vpop.f32.mrf.mxu0
    %v819 = vadd.f32 %v715, %v818
    %820 = vmatmul.bf16.gmra.mxu0 %v412
    %v821 = vpop.f32.mrf.mxu0
    %v822 = vadd.f32 %v718, %v821
    %v823 = vpop.f32.mrf.mxu0
    %v824 = vadd.f32 %v720, %v823
    %825 = vmatmul.bf16.gmra.mxu0 %v415
    %v826 = vpop.f32.mrf.mxu0
    %v827 = vadd.f32 %v723, %v826
    %v828 = vpop.f32.mrf.mxu0
    %v829 = vadd.f32 %v725, %v828
    %830 = vmatmul.bf16.gmra.mxu0 %v418
    %v831 = vpop.f32.mrf.mxu0
    %v832 = vadd.f32 %v728, %v831
    %v833 = vpop.f32.mrf.mxu0
    %v834 = vadd.f32 %v730, %v833
    %835 = vmatmul.bf16.gmra.mxu0 %v421
    %v836 = vpop.f32.mrf.mxu0
    %v837 = vadd.f32 %v733, %v836
    %v838 = vpop.f32.mrf.mxu0
    %v839 = vadd.f32 %v735, %v838
    %840 = vdwg.mxu0
    %841 = vmatpush.bf16.msra.mxu0 0
    %842 = vmatpush.bf16.msra.mxu0 0
    %843 = vmatpush.bf16.msra.mxu0 0
    %844 = vmatpush.bf16.msra.mxu0 0
    %845 = vmatpush.bf16.msra.mxu0 0
    %846 = vmatpush.bf16.msra.mxu0 %v555
    %847 = vmatpush.bf16.msra.mxu0 %v554
    %848 = vmatpush.bf16.msra.mxu0 %v553
    %849 = vmatmul.bf16.gmra.mxu0 %v577
    %v850 = vpop.f32.mrf.mxu0
    %v851 = vadd.f32 %v747, %v850
    %v852 = vpop.f32.mrf.mxu0
    %v853 = vadd.f32 %v749, %v852
    %854 = vmatmul.bf16.gmra.mxu0 %v580
    %v855 = vpop.f32.mrf.mxu0
    %v856 = vadd.f32 %v752, %v855
    %v857 = vpop.f32.mrf.mxu0
    %v858 = vadd.f32 %v754, %v857
    %859 = vmatmul.bf16.gmra.mxu0 %v583
    %v860 = vpop.f32.mrf.mxu0
    %v861 = vadd.f32 %v757, %v860
    %v862 = vpop.f32.mrf.mxu0
    %v863 = vadd.f32 %v759, %v862
    %864 = vmatmul.bf16.gmra.mxu0 %v586
    %v865 = vpop.f32.mrf.mxu0
    %v866 = vadd.f32 %v762, %v865
    %v867 = vpop.f32.mrf.mxu0
    %v868 = vadd.f32 %v764, %v867
    %869 = vmatmul.bf16.gmra.mxu0 %v589
    %v870 = vpop.f32.mrf.mxu0
    %v871 = vadd.f32 %v767, %v870
    %v872 = vpop.f32.mrf.mxu0
    %v873 = vadd.f32 %v769, %v872
    %874 = vmatmul.bf16.gmra.mxu0 %v592
    %v875 = vpop.f32.mrf.mxu0
    %v876 = vadd.f32 %v772, %v875
    %v877 = vpop.f32.mrf.mxu0
    %v878 = vadd.f32 %v774, %v877
    %879 = vmatmul.bf16.gmra.mxu0 %v595
    %v880 = vpop.f32.mrf.mxu0
    %v881 = vadd.f32 %v777, %v880
    %v882 = vpop.f32.mrf.mxu0
    %v883 = vadd.f32 %v779, %v882
    %884 = vmatmul.bf16.gmra.mxu0 %v598
    %v885 = vpop.f32.mrf.mxu0
    %v886 = vadd.f32 %v782, %v885
    %v887 = vpop.f32.mrf.mxu0
    %v888 = vadd.f32 %v784, %v887
    %889 = vmatmul.bf16.gmra.mxu0 %v601
    %v890 = vpop.f32.mrf.mxu0
    %v891 = vadd.f32 %v787, %v890
    %v892 = vpop.f32.mrf.mxu0
    %v893 = vadd.f32 %v789, %v892
    %894 = vmatmul.bf16.gmra.mxu0 %v604
    %v895 = vpop.f32.mrf.mxu0
    %v896 = vadd.f32 %v792, %v895
    %v897 = vpop.f32.mrf.mxu0
    %v898 = vadd.f32 %v794, %v897
    %899 = vmatmul.bf16.gmra.mxu0 %v607
    %v900 = vpop.f32.mrf.mxu0
    %v901 = vadd.f32 %v797, %v900
    %v902 = vpop.f32.mrf.mxu0
    %v903 = vadd.f32 %v799, %v902
    %904 = vmatmul.bf16.gmra.mxu0 %v610
    %v905 = vpop.f32.mrf.mxu0
    %v906 = vadd.f32 %v802, %v905
    %v907 = vpop.f32.mrf.mxu0
    %v908 = vadd.f32 %v804, %v907
    %909 = vmatmul.bf16.gmra.mxu0 %v613
    %v910 = vpop.f32.mrf.mxu0
    %v911 = vadd.f32 %v807, %v910
    %v912 = vpop.f32.mrf.mxu0
    %v913 = vadd.f32 %v809, %v912
    %914 = vmatmul.bf16.gmra.mxu0 %v616
    %v915 = vpop.f32.mrf.mxu0
    %v916 = vadd.f32 %v812, %v915
    %v917 = vpop.f32.mrf.mxu0
    %v918 = vadd.f32 %v814, %v917
    %919 = vmatmul.bf16.gmra.mxu0 %v619
    %v920 = vpop.f32.mrf.mxu0
    %v921 = vadd.f32 %v817, %v920
    %v922 = vpop.f32.mrf.mxu0
    %v923 = vadd.f32 %v819, %v922
    %924 = vmatmul.bf16.gmra.mxu0 %v622
    %v925 = vpop.f32.mrf.mxu0
    %v926 = vadd.f32 %v822, %v925
    %v927 = vpop.f32.mrf.mxu0
    %v928 = vadd.f32 %v824, %v927
    %929 = vmatmul.bf16.gmra.mxu0 %v625
    %v930 = vpop.f32.mrf.mxu0
    %v931 = vadd.f32 %v827, %v930
    %v932 = vpop.f32.mrf.mxu0
    %v933 = vadd.f32 %v829, %v932
    %934 = vmatmul.bf16.gmra.mxu0 %v628
    %v935 = vpop.f32.mrf.mxu0
    %v936 = vadd.f32 %v832, %v935
    %v937 = vpop.f32.mrf.mxu0
    %v938 = vadd.f32 %v834, %v937
    %939 = vmatmul.bf16.gmra.mxu0 %v631
    %v940 = vpop.f32.mrf.mxu0
    %v941 = vadd.f32 %v837, %v940
    %v942 = vpop.f32.mrf.mxu0
    %v943 = vadd.f32 %v839, %v942
    %944 = vdwg.mxu0
    %v945 = vmax.f32 %v851, 0.0
    %v946 = vmax.f32 %v853, 0.0
    %v947 = vmax.f32 %v856, 0.0
    %v948 = vmax.f32 %v858, 0.0
    %v949 = vmax.f32 %v861, 0.0
    %v950 = vmax.f32 %v863, 0.0
    %v951 = vmax.f32 %v866, 0.0
    %v952 = vmax.f32 %v868, 0.0
    %v953 = vmax.f32 %v871, 0.0
    %v954 = vmax.f32 %v873, 0.0
    %v955 = vmax.f32 %v876, 0.0
    %v956 = vmax.f32 %v878, 0.0
    %v957 = vmax.f32 %v881, 0.0
    %v958 = vmax.f32 %v883, 0.0
    %v959 = vmax.f32 %v886, 0.0
    %v960 = vmax.f32 %v888, 0.0
    %v961 = vmax.f32 %v891, 0.0
    %v962 = vmax.f32 %v893, 0.0
    %v963 = vmax.f32 %v896, 0.0
    %v964 = vmax.f32 %v898, 0.0
    %v965 = vmax.f32 %v901, 0.0
    %v966 = vmax.f32 %v903, 0.0
    %v967 = vmax.f32 %v906, 0.0
    %v968 = vmax.f32 %v908, 0.0
    %v969 = vmax.f32 %v911, 0.0
    %v970 = vmax.f32 %v913, 0.0
    %v971 = vmax.f32 %v916, 0.0
    %v972 = vmax.f32 %v918, 0.0
    %v973 = vmax.f32 %v921, 0.0
    %v974 = vmax.f32 %v923, 0.0
    %v975 = vmax.f32 %v926, 0.0
    %v976 = vmax.f32 %v928, 0.0
    %v977 = vmax.f32 %v931, 0.0
    %v978 = vmax.f32 %v933, 0.0
    %v979 = vmax.f32 %v936, 0.0
    %v980 = vmax.f32 %v938, 0.0
    %v981 = vmax.f32 %v941, 0.0
    %v982 = vmax.f32 %v943, 0.0
    %v983 = vpack.c.bf16 %v946, %v945
    %v984 = vpack.c.bf16 %v948, %v947
    %v985 = vpack.c.bf16 %v950, %v949
    %v986 = vpack.c.bf16 %v952, %v951
    %v987 = vpack.c.bf16 %v954, %v953
    %v988 = vpack.c.bf16 %v956, %v955
    %v989 = vpack.c.bf16 %v958, %v957
    %v990 = vpack.c.bf16 %v960, %v959
    %v991 = vpack.c.bf16 %v962, %v961
    %v992 = vpack.c.bf16 %v964, %v963
    %v993 = vpack.c.bf16 %v966, %v965
    %v994 = vpack.c.bf16 %v968, %v967
    %v995 = vpack.c.bf16 %v970, %v969
    %v996 = vpack.c.bf16 %v972, %v971
    %v997 = vpack.c.bf16 %v974, %v973
    %v998 = vpack.c.bf16 %v976, %v975
    %v999 = vpack.c.bf16 %v978, %v977
    %v1000 = vpack.c.bf16 %v980, %v979
    %v1001 = vpack.c.bf16 %v982, %v981
    %v1002 = vld [vmem:[%s3] sm:$0xf]
    %v1003 = vld [vmem:[%s3 + $0x4] sm:$0xf]
    %v1006 = vunpack.c.l.b16 %v1002
    %v1007 = vunpack.c.l.b16 %v1003
    %v1008 = vpack.c.b16 %v1007, %v1006
    %vm1010 = vcmask 130048
    %v1012 = vsel %vm1010, %v983, 0
    %v1015 = vsel %vm1010, %v984, 0
    %v1018 = vsel %vm1010, %v985, 0
    %v1021 = vsel %vm1010, %v986, 0
    %v1024 = vsel %vm1010, %v987, 0
    %v1027 = vsel %vm1010, %v988, 0
    %v1030 = vsel %vm1010, %v989, 0
    %v1033 = vsel %vm1010, %v990, 0
    %v1036 = vsel %vm1010, %v991, 0
    %v1039 = vsel %vm1010, %v992, 0
    %v1042 = vsel %vm1010, %v993, 0
    %v1045 = vsel %vm1010, %v994, 0
    %v1048 = vsel %vm1010, %v995, 0
    %v1051 = vsel %vm1010, %v996, 0
    %v1054 = vsel %vm1010, %v997, 0
    %v1057 = vsel %vm1010, %v998, 0
    %v1060 = vsel %vm1010, %v999, 0
    %v1063 = vsel %vm1010, %v1000, 0
    %v1066 = vsel %vm1010, %v1001, 0
    %1068 = vmatpush.bf16.msra.mxu0 0
    %1069 = vmatpush.bf16.msra.mxu0 0
    %1070 = vmatpush.bf16.msra.mxu0 0
    %1071 = vmatpush.bf16.msra.mxu0 0
    %1072 = vmatpush.bf16.msra.mxu0 0
    %1073 = vmatpush.bf16.msra.mxu0 0
    %1074 = vmatpush.bf16.msra.mxu0 0
    %1075 = vmatpush.bf16.msra.mxu0 %v1008
    %1076 = vmatmul.bf16.gmra.mxu0 %v1012
    %v1077 = vpop.f32.mrf.mxu0
    %v1078 = vadd.f32 0.0, %v1077
    %v1079 = vpop.f32.mrf.mxu0
    %v1080 = vadd.f32 0.0, %v1079
    %1081 = vmatmul.bf16.gmra.mxu0 %v1015
    %v1082 = vpop.f32.mrf.mxu0
    %v1083 = vadd.f32 0.0, %v1082
    %v1084 = vpop.f32.mrf.mxu0
    %v1085 = vadd.f32 0.0, %v1084
    %1086 = vmatmul.bf16.gmra.mxu0 %v1018
    %v1087 = vpop.f32.mrf.mxu0
    %v1088 = vadd.f32 0.0, %v1087
    %v1089 = vpop.f32.mrf.mxu0
    %v1090 = vadd.f32 0.0, %v1089
    %1091 = vmatmul.bf16.gmra.mxu0 %v1021
    %v1092 = vpop.f32.mrf.mxu0
    %v1093 = vadd.f32 0.0, %v1092
    %v1094 = vpop.f32.mrf.mxu0
    %v1095 = vadd.f32 0.0, %v1094
    %1096 = vmatmul.bf16.gmra.mxu0 %v1024
    %v1097 = vpop.f32.mrf.mxu0
    %v1098 = vadd.f32 0.0, %v1097
    %v1099 = vpop.f32.mrf.mxu0
    %v1100 = vadd.f32 0.0, %v1099
    %1101 = vmatmul.bf16.gmra.mxu0 %v1027
    %v1102 = vpop.f32.mrf.mxu0
    %v1103 = vadd.f32 0.0, %v1102
    %v1104 = vpop.f32.mrf.mxu0
    %v1105 = vadd.f32 0.0, %v1104
    %1106 = vmatmul.bf16.gmra.mxu0 %v1030
    %v1107 = vpop.f32.mrf.mxu0
    %v1108 = vadd.f32 0.0, %v1107
    %v1109 = vpop.f32.mrf.mxu0
    %v1110 = vadd.f32 0.0, %v1109
    %1111 = vmatmul.bf16.gmra.mxu0 %v1033
    %v1112 = vpop.f32.mrf.mxu0
    %v1113 = vadd.f32 0.0, %v1112
    %v1114 = vpop.f32.mrf.mxu0
    %v1115 = vadd.f32 0.0, %v1114
    %1116 = vmatmul.bf16.gmra.mxu0 %v1036
    %v1117 = vpop.f32.mrf.mxu0
    %v1118 = vadd.f32 0.0, %v1117
    %v1119 = vpop.f32.mrf.mxu0
    %v1120 = vadd.f32 0.0, %v1119
    %1121 = vmatmul.bf16.gmra.mxu0 %v1039
    %v1122 = vpop.f32.mrf.mxu0
    %v1123 = vadd.f32 0.0, %v1122
    %v1124 = vpop.f32.mrf.mxu0
    %v1125 = vadd.f32 0.0, %v1124
    %1126 = vmatmul.bf16.gmra.mxu0 %v1042
    %v1127 = vpop.f32.mrf.mxu0
    %v1128 = vadd.f32 0.0, %v1127
    %v1129 = vpop.f32.mrf.mxu0
    %v1130 = vadd.f32 0.0, %v1129
    %1131 = vmatmul.bf16.gmra.mxu0 %v1045
    %v1132 = vpop.f32.mrf.mxu0
    %v1133 = vadd.f32 0.0, %v1132
    %v1134 = vpop.f32.mrf.mxu0
    %v1135 = vadd.f32 0.0, %v1134
    %1136 = vmatmul.bf16.gmra.mxu0 %v1048
    %v1137 = vpop.f32.mrf.mxu0
    %v1138 = vadd.f32 0.0, %v1137
    %v1139 = vpop.f32.mrf.mxu0
    %v1140 = vadd.f32 0.0, %v1139
    %1141 = vmatmul.bf16.gmra.mxu0 %v1051
    %v1142 = vpop.f32.mrf.mxu0
    %v1143 = vadd.f32 0.0, %v1142
    %v1144 = vpop.f32.mrf.mxu0
    %v1145 = vadd.f32 0.0, %v1144
    %1146 = vmatmul.bf16.gmra.mxu0 %v1054
    %v1147 = vpop.f32.mrf.mxu0
    %v1148 = vadd.f32 0.0, %v1147
    %v1149 = vpop.f32.mrf.mxu0
    %v1150 = vadd.f32 0.0, %v1149
    %1151 = vmatmul.bf16.gmra.mxu0 %v1057
    %v1152 = vpop.f32.mrf.mxu0
    %v1153 = vadd.f32 0.0, %v1152
    %v1154 = vpop.f32.mrf.mxu0
    %v1155 = vadd.f32 0.0, %v1154
    %1156 = vmatmul.bf16.gmra.mxu0 %v1060
    %v1157 = vpop.f32.mrf.mxu0
    %v1158 = vadd.f32 0.0, %v1157
    %v1159 = vpop.f32.mrf.mxu0
    %v1160 = vadd.f32 0.0, %v1159
    %1161 = vmatmul.bf16.gmra.mxu0 %v1063
    %v1162 = vpop.f32.mrf.mxu0
    %v1163 = vadd.f32 0.0, %v1162
    %v1164 = vpop.f32.mrf.mxu0
    %v1165 = vadd.f32 0.0, %v1164
    %1166 = vmatmul.bf16.gmra.mxu0 %v1066
    %v1167 = vpop.f32.mrf.mxu0
    %v1168 = vadd.f32 0.0, %v1167
    %v1169 = vpop.f32.mrf.mxu0
    %v1170 = vadd.f32 0.0, %v1169
    %1171 = vdwg.mxu0
    %v1172 = vpack.c.bf16 %v1080, %v1078
    %v1173 = vpack.c.bf16 %v1085, %v1083
    %v1174 = vpack.c.bf16 %v1090, %v1088
    %v1175 = vpack.c.bf16 %v1095, %v1093
    %v1176 = vpack.c.bf16 %v1100, %v1098
    %v1177 = vpack.c.bf16 %v1105, %v1103
    %v1178 = vpack.c.bf16 %v1110, %v1108
    %v1179 = vpack.c.bf16 %v1115, %v1113
    %v1180 = vpack.c.bf16 %v1120, %v1118
    %v1181 = vpack.c.bf16 %v1125, %v1123
    %v1182 = vpack.c.bf16 %v1130, %v1128
    %v1183 = vpack.c.bf16 %v1135, %v1133
    %v1184 = vpack.c.bf16 %v1140, %v1138
    %v1185 = vpack.c.bf16 %v1145, %v1143
    %v1186 = vpack.c.bf16 %v1150, %v1148
    %v1187 = vpack.c.bf16 %v1155, %v1153
    %v1188 = vpack.c.bf16 %v1160, %v1158
    %v1189 = vpack.c.bf16 %v1165, %v1163
    %v1190 = vpack.c.bf16 %v1170, %v1168
    %v1191 = vld [vmem:[%s4] sm:$0x1]
    %v1193 = vperm.slane %v1191, 0
    %1195 = vmatpush.bf16.msra.mxu0 %v1179
    %1196 = vmatpush.bf16.msra.mxu0 %v1178
    %1197 = vmatpush.bf16.msra.mxu0 %v1177
    %1198 = vmatpush.bf16.msra.mxu0 %v1176
    %1199 = vmatpush.bf16.msra.mxu0 %v1175
    %1200 = vmatpush.bf16.msra.mxu0 %v1174
    %1201 = vmatpush.bf16.msra.mxu0 %v1173
    %1202 = vmatpush.bf16.msra.mxu0 %v1172
    %1203 = vmatmul.bf16.gmra.mxu0 %v366
    %v1204 = vpop.f32.mrf.mxu0
    %v1205 = vadd.f32 %v1193, %v1204
    %v1206 = vpop.f32.mrf.mxu0
    %v1207 = vadd.f32 %v1193, %v1206
    %1208 = vmatmul.bf16.gmra.mxu0 %v369
    %v1209 = vpop.f32.mrf.mxu0
    %v1210 = vadd.f32 %v1193, %v1209
    %v1211 = vpop.f32.mrf.mxu0
    %v1212 = vadd.f32 %v1193, %v1211
    %1213 = vmatmul.bf16.gmra.mxu0 %v372
    %v1214 = vpop.f32.mrf.mxu0
    %v1215 = vadd.f32 %v1193, %v1214
    %v1216 = vpop.f32.mrf.mxu0
    %v1217 = vadd.f32 %v1193, %v1216
    %1218 = vmatmul.bf16.gmra.mxu0 %v375
    %v1219 = vpop.f32.mrf.mxu0
    %v1220 = vadd.f32 %v1193, %v1219
    %v1221 = vpop.f32.mrf.mxu0
    %v1222 = vadd.f32 %v1193, %v1221
    %1223 = vmatmul.bf16.gmra.mxu0 %v378
    %v1224 = vpop.f32.mrf.mxu0
    %v1225 = vadd.f32 %v1193, %v1224
    %v1226 = vpop.f32.mrf.mxu0
    %v1227 = vadd.f32 %v1193, %v1226
    %1228 = vmatmul.bf16.gmra.mxu0 %v381
    %v1229 = vpop.f32.mrf.mxu0
    %v1230 = vadd.f32 %v1193, %v1229
    %v1231 = vpop.f32.mrf.mxu0
    %v1232 = vadd.f32 %v1193, %v1231
    %1233 = vmatmul.bf16.gmra.mxu0 %v384
    %v1234 = vpop.f32.mrf.mxu0
    %v1235 = vadd.f32 %v1193, %v1234
    %v1236 = vpop.f32.mrf.mxu0
    %v1237 = vadd.f32 %v1193, %v1236
    %1238 = vmatmul.bf16.gmra.mxu0 %v387
    %v1239 = vpop.f32.mrf.mxu0
    %v1240 = vadd.f32 %v1193, %v1239
    %v1241 = vpop.f32.mrf.mxu0
    %v1242 = vadd.f32 %v1193, %v1241
    %1243 = vmatmul.bf16.gmra.mxu0 %v390
    %v1244 = vpop.f32.mrf.mxu0
    %v1245 = vadd.f32 %v1193, %v1244
    %v1246 = vpop.f32.mrf.mxu0
    %v1247 = vadd.f32 %v1193, %v1246
    %1248 = vmatmul.bf16.gmra.mxu0 %v393
    %v1249 = vpop.f32.mrf.mxu0
    %v1250 = vadd.f32 %v1193, %v1249
    %v1251 = vpop.f32.mrf.mxu0
    %v1252 = vadd.f32 %v1193, %v1251
    %1253 = vmatmul.bf16.gmra.mxu0 %v396
    %v1254 = vpop.f32.mrf.mxu0
    %v1255 = vadd.f32 %v1193, %v1254
    %v1256 = vpop.f32.mrf.mxu0
    %v1257 = vadd.f32 %v1193, %v1256
    %1258 = vmatmul.bf16.gmra.mxu0 %v399
    %v1259 = vpop.f32.mrf.mxu0
    %v1260 = vadd.f32 %v1193, %v1259
    %v1261 = vpop.f32.mrf.mxu0
    %v1262 = vadd.f32 %v1193, %v1261
    %1263 = vmatmul.bf16.gmra.mxu0 %v402
    %v1264 = vpop.f32.mrf.mxu0
    %v1265 = vadd.f32 %v1193, %v1264
    %v1266 = vpop.f32.mrf.mxu0
    %v1267 = vadd.f32 %v1193, %v1266
    %1268 = vmatmul.bf16.gmra.mxu0 %v405
    %v1269 = vpop.f32.mrf.mxu0
    %v1270 = vadd.f32 %v1193, %v1269
    %v1271 = vpop.f32.mrf.mxu0
    %v1272 = vadd.f32 %v1193, %v1271
    %1273 = vmatmul.bf16.gmra.mxu0 %v408
    %v1274 = vpop.f32.mrf.mxu0
    %v1275 = vadd.f32 %v1193, %v1274
    %v1276 = vpop.f32.mrf.mxu0
    %v1277 = vadd.f32 %v1193, %v1276
    %1278 = vmatmul.bf16.gmra.mxu0 %v411
    %v1279 = vpop.f32.mrf.mxu0
    %v1280 = vadd.f32 %v1193, %v1279
    %v1281 = vpop.f32.mrf.mxu0
    %v1282 = vadd.f32 %v1193, %v1281
    %1283 = vmatmul.bf16.gmra.mxu0 %v414
    %v1284 = vpop.f32.mrf.mxu0
    %v1285 = vadd.f32 %v1193, %v1284
    %v1286 = vpop.f32.mrf.mxu0
    %v1287 = vadd.f32 %v1193, %v1286
    %1288 = vmatmul.bf16.gmra.mxu0 %v417
    %v1289 = vpop.f32.mrf.mxu0
    %v1290 = vadd.f32 %v1193, %v1289
    %v1291 = vpop.f32.mrf.mxu0
    %v1292 = vadd.f32 %v1193, %v1291
    %1293 = vmatmul.bf16.gmra.mxu0 %v420
    %v1294 = vpop.f32.mrf.mxu0
    %v1295 = vadd.f32 %v1193, %v1294
    %v1296 = vpop.f32.mrf.mxu0
    %v1297 = vadd.f32 %v1193, %v1296
    %1298 = vdwg.mxu0
    %1299 = vmatpush.bf16.msra.mxu0 %v1187
    %1300 = vmatpush.bf16.msra.mxu0 %v1186
    %1301 = vmatpush.bf16.msra.mxu0 %v1185
    %1302 = vmatpush.bf16.msra.mxu0 %v1184
    %1303 = vmatpush.bf16.msra.mxu0 %v1183
    %1304 = vmatpush.bf16.msra.mxu0 %v1182
    %1305 = vmatpush.bf16.msra.mxu0 %v1181
    %1306 = vmatpush.bf16.msra.mxu0 %v1180
    %1307 = vmatmul.bf16.gmra.mxu0 %v367
    %v1308 = vpop.f32.mrf.mxu0
    %v1309 = vadd.f32 %v1205, %v1308
    %v1310 = vpop.f32.mrf.mxu0
    %v1311 = vadd.f32 %v1207, %v1310
    %1312 = vmatmul.bf16.gmra.mxu0 %v370
    %v1313 = vpop.f32.mrf.mxu0
    %v1314 = vadd.f32 %v1210, %v1313
    %v1315 = vpop.f32.mrf.mxu0
    %v1316 = vadd.f32 %v1212, %v1315
    %1317 = vmatmul.bf16.gmra.mxu0 %v373
    %v1318 = vpop.f32.mrf.mxu0
    %v1319 = vadd.f32 %v1215, %v1318
    %v1320 = vpop.f32.mrf.mxu0
    %v1321 = vadd.f32 %v1217, %v1320
    %1322 = vmatmul.bf16.gmra.mxu0 %v376
    %v1323 = vpop.f32.mrf.mxu0
    %v1324 = vadd.f32 %v1220, %v1323
    %v1325 = vpop.f32.mrf.mxu0
    %v1326 = vadd.f32 %v1222, %v1325
    %1327 = vmatmul.bf16.gmra.mxu0 %v379
    %v1328 = vpop.f32.mrf.mxu0
    %v1329 = vadd.f32 %v1225, %v1328
    %v1330 = vpop.f32.mrf.mxu0
    %v1331 = vadd.f32 %v1227, %v1330
    %1332 = vmatmul.bf16.gmra.mxu0 %v382
    %v1333 = vpop.f32.mrf.mxu0
    %v1334 = vadd.f32 %v1230, %v1333
    %v1335 = vpop.f32.mrf.mxu0
    %v1336 = vadd.f32 %v1232, %v1335
    %1337 = vmatmul.bf16.gmra.mxu0 %v385
    %v1338 = vpop.f32.mrf.mxu0
    %v1339 = vadd.f32 %v1235, %v1338
    %v1340 = vpop.f32.mrf.mxu0
    %v1341 = vadd.f32 %v1237, %v1340
    %1342 = vmatmul.bf16.gmra.mxu0 %v388
    %v1343 = vpop.f32.mrf.mxu0
    %v1344 = vadd.f32 %v1240, %v1343
    %v1345 = vpop.f32.mrf.mxu0
    %v1346 = vadd.f32 %v1242, %v1345
    %1347 = vmatmul.bf16.gmra.mxu0 %v391
    %v1348 = vpop.f32.mrf.mxu0
    %v1349 = vadd.f32 %v1245, %v1348
    %v1350 = vpop.f32.mrf.mxu0
    %v1351 = vadd.f32 %v1247, %v1350
    %1352 = vmatmul.bf16.gmra.mxu0 %v394
    %v1353 = vpop.f32.mrf.mxu0
    %v1354 = vadd.f32 %v1250, %v1353
    %v1355 = vpop.f32.mrf.mxu0
    %v1356 = vadd.f32 %v1252, %v1355
    %1357 = vmatmul.bf16.gmra.mxu0 %v397
    %v1358 = vpop.f32.mrf.mxu0
    %v1359 = vadd.f32 %v1255, %v1358
    %v1360 = vpop.f32.mrf.mxu0
    %v1361 = vadd.f32 %v1257, %v1360
    %1362 = vmatmul.bf16.gmra.mxu0 %v400
    %v1363 = vpop.f32.mrf.mxu0
    %v1364 = vadd.f32 %v1260, %v1363
    %v1365 = vpop.f32.mrf.mxu0
    %v1366 = vadd.f32 %v1262, %v1365
    %1367 = vmatmul.bf16.gmra.mxu0 %v403
    %v1368 = vpop.f32.mrf.mxu0
    %v1369 = vadd.f32 %v1265, %v1368
    %v1370 = vpop.f32.mrf.mxu0
    %v1371 = vadd.f32 %v1267, %v1370
    %1372 = vmatmul.bf16.gmra.mxu0 %v406
    %v1373 = vpop.f32.mrf.mxu0
    %v1374 = vadd.f32 %v1270, %v1373
    %v1375 = vpop.f32.mrf.mxu0
    %v1376 = vadd.f32 %v1272, %v1375
    %1377 = vmatmul.bf16.gmra.mxu0 %v409
    %v1378 = vpop.f32.mrf.mxu0
    %v1379 = vadd.f32 %v1275, %v1378
    %v1380 = vpop.f32.mrf.mxu0
    %v1381 = vadd.f32 %v1277, %v1380
    %1382 = vmatmul.bf16.gmra.mxu0 %v412
    %v1383 = vpop.f32.mrf.mxu0
    %v1384 = vadd.f32 %v1280, %v1383
    %v1385 = vpop.f32.mrf.mxu0
    %v1386 = vadd.f32 %v1282, %v1385
    %1387 = vmatmul.bf16.gmra.mxu0 %v415
    %v1388 = vpop.f32.mrf.mxu0
    %v1389 = vadd.f32 %v1285, %v1388
    %v1390 = vpop.f32.mrf.mxu0
    %v1391 = vadd.f32 %v1287, %v1390
    %1392 = vmatmul.bf16.gmra.mxu0 %v418
    %v1393 = vpop.f32.mrf.mxu0
    %v1394 = vadd.f32 %v1290, %v1393
    %v1395 = vpop.f32.mrf.mxu0
    %v1396 = vadd.f32 %v1292, %v1395
    %1397 = vmatmul.bf16.gmra.mxu0 %v421
    %v1398 = vpop.f32.mrf.mxu0
    %v1399 = vadd.f32 %v1295, %v1398
    %v1400 = vpop.f32.mrf.mxu0
    %v1401 = vadd.f32 %v1297, %v1400
    %1402 = vdwg.mxu0
    %1403 = vmatpush.bf16.msra.mxu0 0
    %1404 = vmatpush.bf16.msra.mxu0 0
    %1405 = vmatpush.bf16.msra.mxu0 0
    %1406 = vmatpush.bf16.msra.mxu0 0
    %1407 = vmatpush.bf16.msra.mxu0 0
    %1408 = vmatpush.bf16.msra.mxu0 %v1190
    %1409 = vmatpush.bf16.msra.mxu0 %v1189
    %1410 = vmatpush.bf16.msra.mxu0 %v1188
    %1411 = vmatmul.bf16.gmra.mxu0 %v577
    %v1412 = vpop.f32.mrf.mxu0
    %v1413 = vadd.f32 %v1309, %v1412
    %v1414 = vpop.f32.mrf.mxu0
    %v1415 = vadd.f32 %v1311, %v1414
    %1416 = vmatmul.bf16.gmra.mxu0 %v580
    %v1417 = vpop.f32.mrf.mxu0
    %v1418 = vadd.f32 %v1314, %v1417
    %v1419 = vpop.f32.mrf.mxu0
    %v1420 = vadd.f32 %v1316, %v1419
    %1421 = vmatmul.bf16.gmra.mxu0 %v583
    %v1422 = vpop.f32.mrf.mxu0
    %v1423 = vadd.f32 %v1319, %v1422
    %v1424 = vpop.f32.mrf.mxu0
    %v1425 = vadd.f32 %v1321, %v1424
    %1426 = vmatmul.bf16.gmra.mxu0 %v586
    %v1427 = vpop.f32.mrf.mxu0
    %v1428 = vadd.f32 %v1324, %v1427
    %v1429 = vpop.f32.mrf.mxu0
    %v1430 = vadd.f32 %v1326, %v1429
    %1431 = vmatmul.bf16.gmra.mxu0 %v589
    %v1432 = vpop.f32.mrf.mxu0
    %v1433 = vadd.f32 %v1329, %v1432
    %v1434 = vpop.f32.mrf.mxu0
    %v1435 = vadd.f32 %v1331, %v1434
    %1436 = vmatmul.bf16.gmra.mxu0 %v592
    %v1437 = vpop.f32.mrf.mxu0
    %v1438 = vadd.f32 %v1334, %v1437
    %v1439 = vpop.f32.mrf.mxu0
    %v1440 = vadd.f32 %v1336, %v1439
    %1441 = vmatmul.bf16.gmra.mxu0 %v595
    %v1442 = vpop.f32.mrf.mxu0
    %v1443 = vadd.f32 %v1339, %v1442
    %v1444 = vpop.f32.mrf.mxu0
    %v1445 = vadd.f32 %v1341, %v1444
    %1446 = vmatmul.bf16.gmra.mxu0 %v598
    %v1447 = vpop.f32.mrf.mxu0
    %v1448 = vadd.f32 %v1344, %v1447
    %v1449 = vpop.f32.mrf.mxu0
    %v1450 = vadd.f32 %v1346, %v1449
    %1451 = vmatmul.bf16.gmra.mxu0 %v601
    %v1452 = vpop.f32.mrf.mxu0
    %v1453 = vadd.f32 %v1349, %v1452
    %v1454 = vpop.f32.mrf.mxu0
    %v1455 = vadd.f32 %v1351, %v1454
    %1456 = vmatmul.bf16.gmra.mxu0 %v604
    %v1457 = vpop.f32.mrf.mxu0
    %v1458 = vadd.f32 %v1354, %v1457
    %v1459 = vpop.f32.mrf.mxu0
    %v1460 = vadd.f32 %v1356, %v1459
    %1461 = vmatmul.bf16.gmra.mxu0 %v607
    %v1462 = vpop.f32.mrf.mxu0
    %v1463 = vadd.f32 %v1359, %v1462
    %v1464 = vpop.f32.mrf.mxu0
    %v1465 = vadd.f32 %v1361, %v1464
    %1466 = vmatmul.bf16.gmra.mxu0 %v610
    %v1467 = vpop.f32.mrf.mxu0
    %v1468 = vadd.f32 %v1364, %v1467
    %v1469 = vpop.f32.mrf.mxu0
    %v1470 = vadd.f32 %v1366, %v1469
    %1471 = vmatmul.bf16.gmra.mxu0 %v613
    %v1472 = vpop.f32.mrf.mxu0
    %v1473 = vadd.f32 %v1369, %v1472
    %v1474 = vpop.f32.mrf.mxu0
    %v1475 = vadd.f32 %v1371, %v1474
    %1476 = vmatmul.bf16.gmra.mxu0 %v616
    %v1477 = vpop.f32.mrf.mxu0
    %v1478 = vadd.f32 %v1374, %v1477
    %v1479 = vpop.f32.mrf.mxu0
    %v1480 = vadd.f32 %v1376, %v1479
    %1481 = vmatmul.bf16.gmra.mxu0 %v619
    %v1482 = vpop.f32.mrf.mxu0
    %v1483 = vadd.f32 %v1379, %v1482
    %v1484 = vpop.f32.mrf.mxu0
    %v1485 = vadd.f32 %v1381, %v1484
    %1486 = vmatmul.bf16.gmra.mxu0 %v622
    %v1487 = vpop.f32.mrf.mxu0
    %v1488 = vadd.f32 %v1384, %v1487
    %v1489 = vpop.f32.mrf.mxu0
    %v1490 = vadd.f32 %v1386, %v1489
    %1491 = vmatmul.bf16.gmra.mxu0 %v625
    %v1492 = vpop.f32.mrf.mxu0
    %v1493 = vadd.f32 %v1389, %v1492
    %v1494 = vpop.f32.mrf.mxu0
    %v1495 = vadd.f32 %v1391, %v1494
    %1496 = vmatmul.bf16.gmra.mxu0 %v628
    %v1497 = vpop.f32.mrf.mxu0
    %v1498 = vadd.f32 %v1394, %v1497
    %v1499 = vpop.f32.mrf.mxu0
    %v1500 = vadd.f32 %v1396, %v1499
    %1501 = vmatmul.bf16.gmra.mxu0 %v631
    %v1502 = vpop.f32.mrf.mxu0
    %v1503 = vadd.f32 %v1399, %v1502
    %v1504 = vpop.f32.mrf.mxu0
    %v1505 = vadd.f32 %v1401, %v1504
    %1506 = vdwg.mxu0
    %v1507 = vmax.f32 %v1413, 0.0
    %v1508 = vmax.f32 %v1415, 0.0
    %v1509 = vmax.f32 %v1418, 0.0
    %v1510 = vmax.f32 %v1420, 0.0
    %v1511 = vmax.f32 %v1423, 0.0
    %v1512 = vmax.f32 %v1425, 0.0
    %v1513 = vmax.f32 %v1428, 0.0
    %v1514 = vmax.f32 %v1430, 0.0
    %v1515 = vmax.f32 %v1433, 0.0
    %v1516 = vmax.f32 %v1435, 0.0
    %v1517 = vmax.f32 %v1438, 0.0
    %v1518 = vmax.f32 %v1440, 0.0
    %v1519 = vmax.f32 %v1443, 0.0
    %v1520 = vmax.f32 %v1445, 0.0
    %v1521 = vmax.f32 %v1448, 0.0
    %v1522 = vmax.f32 %v1450, 0.0
    %v1523 = vmax.f32 %v1453, 0.0
    %v1524 = vmax.f32 %v1455, 0.0
    %v1525 = vmax.f32 %v1458, 0.0
    %v1526 = vmax.f32 %v1460, 0.0
    %v1527 = vmax.f32 %v1463, 0.0
    %v1528 = vmax.f32 %v1465, 0.0
    %v1529 = vmax.f32 %v1468, 0.0
    %v1530 = vmax.f32 %v1470, 0.0
    %v1531 = vmax.f32 %v1473, 0.0
    %v1532 = vmax.f32 %v1475, 0.0
    %v1533 = vmax.f32 %v1478, 0.0
    %v1534 = vmax.f32 %v1480, 0.0
    %v1535 = vmax.f32 %v1483, 0.0
    %v1536 = vmax.f32 %v1485, 0.0
    %v1537 = vmax.f32 %v1488, 0.0
    %v1538 = vmax.f32 %v1490, 0.0
    %v1539 = vmax.f32 %v1493, 0.0
    %v1540 = vmax.f32 %v1495, 0.0
    %v1541 = vmax.f32 %v1498, 0.0
    %v1542 = vmax.f32 %v1500, 0.0
    %v1543 = vmax.f32 %v1503, 0.0
    %v1544 = vmax.f32 %v1505, 0.0
    %s1545 = sld [smem:[#allocation7]]
    %v1546 = vstv %s1545
    %v1547 = vmul.f32 %v1507, %v1546
    %v1548 = vmul.f32 %v1508, %v1546
    %v1549 = vmul.f32 %v1509, %v1546
    %v1550 = vmul.f32 %v1510, %v1546
    %v1551 = vmul.f32 %v1511, %v1546
    %v1552 = vmul.f32 %v1512, %v1546
    %v1553 = vmul.f32 %v1513, %v1546
    %v1554 = vmul.f32 %v1514, %v1546
    %v1555 = vmul.f32 %v1515, %v1546
    %v1556 = vmul.f32 %v1516, %v1546
    %v1557 = vmul.f32 %v1517, %v1546
    %v1558 = vmul.f32 %v1518, %v1546
    %v1559 = vmul.f32 %v1519, %v1546
    %v1560 = vmul.f32 %v1520, %v1546
    %v1561 = vmul.f32 %v1521, %v1546
    %v1562 = vmul.f32 %v1522, %v1546
    %v1563 = vmul.f32 %v1523, %v1546
    %v1564 = vmul.f32 %v1524, %v1546
    %v1565 = vmul.f32 %v1525, %v1546
    %v1566 = vmul.f32 %v1526, %v1546
    %v1567 = vmul.f32 %v1527, %v1546
    %v1568 = vmul.f32 %v1528, %v1546
    %v1569 = vmul.f32 %v1529, %v1546
    %v1570 = vmul.f32 %v1530, %v1546
    %v1571 = vmul.f32 %v1531, %v1546
    %v1572 = vmul.f32 %v1532, %v1546
    %v1573 = vmul.f32 %v1533, %v1546
    %v1574 = vmul.f32 %v1534, %v1546
    %v1575 = vmul.f32 %v1535, %v1546
    %v1576 = vmul.f32 %v1536, %v1546
    %v1577 = vmul.f32 %v1537, %v1546
    %v1578 = vmul.f32 %v1538, %v1546
    %v1579 = vmul.f32 %v1539, %v1546
    %v1580 = vmul.f32 %v1540, %v1546
    %v1581 = vmul.f32 %v1541, %v1546
    %v1582 = vmul.f32 %v1542, %v1546
    %v1583 = vmul.f32 %v1543, %v1546
    %v1584 = vmul.f32 %v1544, %v1546
    %s1585 = sld [smem:[#allocation7 + $0x1]]
    %v1586 = vstv %s1585
    %v1587 = vmul.f32 %v1507, %v1586
    %v1588 = vmul.f32 %v1508, %v1586
    %v1589 = vmul.f32 %v1509, %v1586
    %v1590 = vmul.f32 %v1510, %v1586
    %v1591 = vmul.f32 %v1511, %v1586
    %v1592 = vmul.f32 %v1512, %v1586
    %v1593 = vmul.f32 %v1513, %v1586
    %v1594 = vmul.f32 %v1514, %v1586
    %v1595 = vmul.f32 %v1515, %v1586
    %v1596 = vmul.f32 %v1516, %v1586
    %v1597 = vmul.f32 %v1517, %v1586
    %v1598 = vmul.f32 %v1518, %v1586
    %v1599 = vmul.f32 %v1519, %v1586
    %v1600 = vmul.f32 %v1520, %v1586
    %v1601 = vmul.f32 %v1521, %v1586
    %v1602 = vmul.f32 %v1522, %v1586
    %v1603 = vmul.f32 %v1523, %v1586
    %v1604 = vmul.f32 %v1524, %v1586
    %v1605 = vmul.f32 %v1525, %v1586
    %v1606 = vmul.f32 %v1526, %v1586
    %v1607 = vmul.f32 %v1527, %v1586
    %v1608 = vmul.f32 %v1528, %v1586
    %v1609 = vmul.f32 %v1529, %v1586
    %v1610 = vmul.f32 %v1530, %v1586
    %v1611 = vmul.f32 %v1531, %v1586
    %v1612 = vmul.f32 %v1532, %v1586
    %v1613 = vmul.f32 %v1533, %v1586
    %v1614 = vmul.f32 %v1534, %v1586
    %v1615 = vmul.f32 %v1535, %v1586
    %v1616 = vmul.f32 %v1536, %v1586
    %v1617 = vmul.f32 %v1537, %v1586
    %v1618 = vmul.f32 %v1538, %v1586
    %v1619 = vmul.f32 %v1539, %v1586
    %v1620 = vmul.f32 %v1540, %v1586
    %v1621 = vmul.f32 %v1541, %v1586
    %v1622 = vmul.f32 %v1542, %v1586
    %v1623 = vmul.f32 %v1543, %v1586
    %v1624 = vmul.f32 %v1544, %v1586
    %1663 = vrot.lane.b32.xlu0 %v1587, 127
    %v1664 = vpop.permute.xlu0 %1663
    %1665 = vrot.lane.b32.xlu0 %v1588, 127
    %v1666 = vpop.permute.xlu0 %1665
    %1667 = vrot.lane.b32.xlu0 %v1589, 127
    %v1668 = vpop.permute.xlu0 %1667
    %1669 = vrot.lane.b32.xlu0 %v1590, 127
    %v1670 = vpop.permute.xlu0 %1669
    %1671 = vrot.lane.b32.xlu0 %v1591, 127
    %v1672 = vpop.permute.xlu0 %1671
    %1673 = vrot.lane.b32.xlu0 %v1592, 127
    %v1674 = vpop.permute.xlu0 %1673
    %1675 = vrot.lane.b32.xlu0 %v1593, 127
    %v1676 = vpop.permute.xlu0 %1675
    %1677 = vrot.lane.b32.xlu0 %v1594, 127
    %v1678 = vpop.permute.xlu0 %1677
    %1679 = vrot.lane.b32.xlu0 %v1595, 127
    %v1680 = vpop.permute.xlu0 %1679
    %1681 = vrot.lane.b32.xlu0 %v1596, 127
    %v1682 = vpop.permute.xlu0 %1681
    %1683 = vrot.lane.b32.xlu0 %v1597, 127
    %v1684 = vpop.permute.xlu0 %1683
    %1685 = vrot.lane.b32.xlu0 %v1598, 127
    %v1686 = vpop.permute.xlu0 %1685
    %1687 = vrot.lane.b32.xlu0 %v1599, 127
    %v1688 = vpop.permute.xlu0 %1687
    %1689 = vrot.lane.b32.xlu0 %v1600, 127
    %v1690 = vpop.permute.xlu0 %1689
    %1691 = vrot.lane.b32.xlu0 %v1601, 127
    %v1692 = vpop.permute.xlu0 %1691
    %1693 = vrot.lane.b32.xlu0 %v1602, 127
    %v1694 = vpop.permute.xlu0 %1693
    %1695 = vrot.lane.b32.xlu0 %v1603, 127
    %v1696 = vpop.permute.xlu0 %1695
    %1697 = vrot.lane.b32.xlu0 %v1604, 127
    %v1698 = vpop.permute.xlu0 %1697
    %1699 = vrot.lane.b32.xlu0 %v1605, 127
    %v1700 = vpop.permute.xlu0 %1699
    %1701 = vrot.lane.b32.xlu0 %v1606, 127
    %v1702 = vpop.permute.xlu0 %1701
    %1703 = vrot.lane.b32.xlu0 %v1607, 127
    %v1704 = vpop.permute.xlu0 %1703
    %1705 = vrot.lane.b32.xlu0 %v1608, 127
    %v1706 = vpop.permute.xlu0 %1705
    %1707 = vrot.lane.b32.xlu0 %v1609, 127
    %v1708 = vpop.permute.xlu0 %1707
    %1709 = vrot.lane.b32.xlu0 %v1610, 127
    %v1710 = vpop.permute.xlu0 %1709
    %1711 = vrot.lane.b32.xlu0 %v1611, 127
    %v1712 = vpop.permute.xlu0 %1711
    %1713 = vrot.lane.b32.xlu0 %v1612, 127
    %v1714 = vpop.permute.xlu0 %1713
    %1715 = vrot.lane.b32.xlu0 %v1613, 127
    %v1716 = vpop.permute.xlu0 %1715
    %1717 = vrot.lane.b32.xlu0 %v1614, 127
    %v1718 = vpop.permute.xlu0 %1717
    %1719 = vrot.lane.b32.xlu0 %v1615, 127
    %v1720 = vpop.permute.xlu0 %1719
    %1721 = vrot.lane.b32.xlu0 %v1616, 127
    %v1722 = vpop.permute.xlu0 %1721
    %1723 = vrot.lane.b32.xlu0 %v1617, 127
    %v1724 = vpop.permute.xlu0 %1723
    %1725 = vrot.lane.b32.xlu0 %v1618, 127
    %v1726 = vpop.permute.xlu0 %1725
    %1727 = vrot.lane.b32.xlu0 %v1619, 127
    %v1728 = vpop.permute.xlu0 %1727
    %1729 = vrot.lane.b32.xlu0 %v1620, 127
    %v1730 = vpop.permute.xlu0 %1729
    %1731 = vrot.lane.b32.xlu0 %v1621, 127
    %v1732 = vpop.permute.xlu0 %1731
    %1733 = vrot.lane.b32.xlu0 %v1622, 127
    %v1734 = vpop.permute.xlu0 %1733
    %1735 = vrot.lane.b32.xlu0 %v1623, 127
    %v1736 = vpop.permute.xlu0 %1735
    %1737 = vrot.lane.b32.xlu0 %v1624, 127
    %v1738 = vpop.permute.xlu0 %1737
    %v1777 = vadd.f32 %v1547, %v1664
    %v1778 = vadd.f32 %v1548, %v1666
    %v1779 = vadd.f32 %v1549, %v1668
    %v1780 = vadd.f32 %v1550, %v1670
    %v1781 = vadd.f32 %v1551, %v1672
    %v1782 = vadd.f32 %v1552, %v1674
    %v1783 = vadd.f32 %v1553, %v1676
    %v1784 = vadd.f32 %v1554, %v1678
    %v1785 = vadd.f32 %v1555, %v1680
    %v1786 = vadd.f32 %v1556, %v1682
    %v1787 = vadd.f32 %v1557, %v1684
    %v1788 = vadd.f32 %v1558, %v1686
    %v1789 = vadd.f32 %v1559, %v1688
    %v1790 = vadd.f32 %v1560, %v1690
    %v1791 = vadd.f32 %v1561, %v1692
    %v1792 = vadd.f32 %v1562, %v1694
    %v1793 = vadd.f32 %v1563, %v1696
    %v1794 = vadd.f32 %v1564, %v1698
    %v1795 = vadd.f32 %v1565, %v1700
    %v1796 = vadd.f32 %v1566, %v1702
    %v1797 = vadd.f32 %v1567, %v1704
    %v1798 = vadd.f32 %v1568, %v1706
    %v1799 = vadd.f32 %v1569, %v1708
    %v1800 = vadd.f32 %v1570, %v1710
    %v1801 = vadd.f32 %v1571, %v1712
    %v1802 = vadd.f32 %v1572, %v1714
    %v1803 = vadd.f32 %v1573, %v1716
    %v1804 = vadd.f32 %v1574, %v1718
    %v1805 = vadd.f32 %v1575, %v1720
    %v1806 = vadd.f32 %v1576, %v1722
    %v1807 = vadd.f32 %v1577, %v1724
    %v1808 = vadd.f32 %v1578, %v1726
    %v1809 = vadd.f32 %v1579, %v1728
    %v1810 = vadd.f32 %v1580, %v1730
    %v1811 = vadd.f32 %v1581, %v1732
    %v1812 = vadd.f32 %v1582, %v1734
    %v1813 = vadd.f32 %v1583, %v1736
    %v1814 = vadd.f32 %v1584, %v1738
    %s1815 = sld [smem:[#allocation2]]
    %v1816 = vstv %s1815
    %v1817 = vadd.f32 %v1777, %v1816
    %v1818 = vadd.f32 %v1778, %v1816
    %v1819 = vadd.f32 %v1779, %v1816
    %v1820 = vadd.f32 %v1780, %v1816
    %v1821 = vadd.f32 %v1781, %v1816
    %v1822 = vadd.f32 %v1782, %v1816
    %v1823 = vadd.f32 %v1783, %v1816
    %v1824 = vadd.f32 %v1784, %v1816
    %v1825 = vadd.f32 %v1785, %v1816
    %v1826 = vadd.f32 %v1786, %v1816
    %v1827 = vadd.f32 %v1787, %v1816
    %v1828 = vadd.f32 %v1788, %v1816
    %v1829 = vadd.f32 %v1789, %v1816
    %v1830 = vadd.f32 %v1790, %v1816
    %v1831 = vadd.f32 %v1791, %v1816
    %v1832 = vadd.f32 %v1792, %v1816
    %v1833 = vadd.f32 %v1793, %v1816
    %v1834 = vadd.f32 %v1794, %v1816
    %v1835 = vadd.f32 %v1795, %v1816
    %v1836 = vadd.f32 %v1796, %v1816
    %v1837 = vadd.f32 %v1797, %v1816
    %v1838 = vadd.f32 %v1798, %v1816
    %v1839 = vadd.f32 %v1799, %v1816
    %v1840 = vadd.f32 %v1800, %v1816
    %v1841 = vadd.f32 %v1801, %v1816
    %v1842 = vadd.f32 %v1802, %v1816
    %v1843 = vadd.f32 %v1803, %v1816
    %v1844 = vadd.f32 %v1804, %v1816
    %v1845 = vadd.f32 %v1805, %v1816
    %v1846 = vadd.f32 %v1806, %v1816
    %v1847 = vadd.f32 %v1807, %v1816
    %v1848 = vadd.f32 %v1808, %v1816
    %v1849 = vadd.f32 %v1809, %v1816
    %v1850 = vadd.f32 %v1810, %v1816
    %v1851 = vadd.f32 %v1811, %v1816
    %v1852 = vadd.f32 %v1812, %v1816
    %v1853 = vadd.f32 %v1813, %v1816
    %v1854 = vadd.f32 %v1814, %v1816
    %v1855 = vxor.u32 %v1817, 2147483648
    %v1856 = vxor.u32 %v1818, 2147483648
    %v1857 = vxor.u32 %v1819, 2147483648
    %v1858 = vxor.u32 %v1820, 2147483648
    %v1859 = vxor.u32 %v1821, 2147483648
    %v1860 = vxor.u32 %v1822, 2147483648
    %v1861 = vxor.u32 %v1823, 2147483648
    %v1862 = vxor.u32 %v1824, 2147483648
    %v1863 = vxor.u32 %v1825, 2147483648
    %v1864 = vxor.u32 %v1826, 2147483648
    %v1865 = vxor.u32 %v1827, 2147483648
    %v1866 = vxor.u32 %v1828, 2147483648
    %v1867 = vxor.u32 %v1829, 2147483648
    %v1868 = vxor.u32 %v1830, 2147483648
    %v1869 = vxor.u32 %v1831, 2147483648
    %v1870 = vxor.u32 %v1832, 2147483648
    %v1871 = vxor.u32 %v1833, 2147483648
    %v1872 = vxor.u32 %v1834, 2147483648
    %v1873 = vxor.u32 %v1835, 2147483648
    %v1874 = vxor.u32 %v1836, 2147483648
    %v1875 = vxor.u32 %v1837, 2147483648
    %v1876 = vxor.u32 %v1838, 2147483648
    %v1877 = vxor.u32 %v1839, 2147483648
    %v1878 = vxor.u32 %v1840, 2147483648
    %v1879 = vxor.u32 %v1841, 2147483648
    %v1880 = vxor.u32 %v1842, 2147483648
    %v1881 = vxor.u32 %v1843, 2147483648
    %v1882 = vxor.u32 %v1844, 2147483648
    %v1883 = vxor.u32 %v1845, 2147483648
    %v1884 = vxor.u32 %v1846, 2147483648
    %v1885 = vxor.u32 %v1847, 2147483648
    %v1886 = vxor.u32 %v1848, 2147483648
    %v1887 = vxor.u32 %v1849, 2147483648
    %v1888 = vxor.u32 %v1850, 2147483648
    %v1889 = vxor.u32 %v1851, 2147483648
    %v1890 = vxor.u32 %v1852, 2147483648
    %v1891 = vxor.u32 %v1853, 2147483648
    %v1892 = vxor.u32 %v1854, 2147483648
    %v1893 = vmul.f32 %v1855, 1.442695
    %v1894 = vpow.pop %v1893
    %v1895 = vmul.f32 %v1856, 1.442695
    %v1896 = vpow.pop %v1895
    %v1897 = vmul.f32 %v1857, 1.442695
    %v1898 = vpow.pop %v1897
    %v1899 = vmul.f32 %v1858, 1.442695
    %v1900 = vpow.pop %v1899
    %v1901 = vmul.f32 %v1859, 1.442695
    %v1902 = vpow.pop %v1901
    %v1903 = vmul.f32 %v1860, 1.442695
    %v1904 = vpow.pop %v1903
    %v1905 = vmul.f32 %v1861, 1.442695
    %v1906 = vpow.pop %v1905
    %v1907 = vmul.f32 %v1862, 1.442695
    %v1908 = vpow.pop %v1907
    %v1909 = vmul.f32 %v1863, 1.442695
    %v1910 = vpow.pop %v1909
    %v1911 = vmul.f32 %v1864, 1.442695
    %v1912 = vpow.pop %v1911
    %v1913 = vmul.f32 %v1865, 1.442695
    %v1914 = vpow.pop %v1913
    %v1915 = vmul.f32 %v1866, 1.442695
    %v1916 = vpow.pop %v1915
    %v1917 = vmul.f32 %v1867, 1.442695
    %v1918 = vpow.pop %v1917
    %v1919 = vmul.f32 %v1868, 1.442695
    %v1920 = vpow.pop %v1919
    %v1921 = vmul.f32 %v1869, 1.442695
    %v1922 = vpow.pop %v1921
    %v1923 = vmul.f32 %v1870, 1.442695
    %v1924 = vpow.pop %v1923
    %v1925 = vmul.f32 %v1871, 1.442695
    %v1926 = vpow.pop %v1925
    %v1927 = vmul.f32 %v1872, 1.442695
    %v1928 = vpow.pop %v1927
    %v1929 = vmul.f32 %v1873, 1.442695
    %v1930 = vpow.pop %v1929
    %v1931 = vmul.f32 %v1874, 1.442695
    %v1932 = vpow.pop %v1931
    %v1933 = vmul.f32 %v1875, 1.442695
    %v1934 = vpow.pop %v1933
    %v1935 = vmul.f32 %v1876, 1.442695
    %v1936 = vpow.pop %v1935
    %v1937 = vmul.f32 %v1877, 1.442695
    %v1938 = vpow.pop %v1937
    %v1939 = vmul.f32 %v1878, 1.442695
    %v1940 = vpow.pop %v1939
    %v1941 = vmul.f32 %v1879, 1.442695
    %v1942 = vpow.pop %v1941
    %v1943 = vmul.f32 %v1880, 1.442695
    %v1944 = vpow.pop %v1943
    %v1945 = vmul.f32 %v1881, 1.442695
    %v1946 = vpow.pop %v1945
    %v1947 = vmul.f32 %v1882, 1.442695
    %v1948 = vpow.pop %v1947
    %v1949 = vmul.f32 %v1883, 1.442695
    %v1950 = vpow.pop %v1949
    %v1951 = vmul.f32 %v1884, 1.442695
    %v1952 = vpow.pop %v1951
    %v1953 = vmul.f32 %v1885, 1.442695
    %v1954 = vpow.pop %v1953
    %v1955 = vmul.f32 %v1886, 1.442695
    %v1956 = vpow.pop %v1955
    %v1957 = vmul.f32 %v1887, 1.442695
    %v1958 = vpow.pop %v1957
    %v1959 = vmul.f32 %v1888, 1.442695
    %v1960 = vpow.pop %v1959
    %v1961 = vmul.f32 %v1889, 1.442695
    %v1962 = vpow.pop %v1961
    %v1963 = vmul.f32 %v1890, 1.442695
    %v1964 = vpow.pop %v1963
    %v1965 = vmul.f32 %v1891, 1.442695
    %v1966 = vpow.pop %v1965
    %v1967 = vmul.f32 %v1892, 1.442695
    %v1968 = vpow.pop %v1967
    %v1969 = vadd.f32 %v1894, 1.0
    %v1970 = vadd.f32 %v1896, 1.0
    %v1971 = vadd.f32 %v1898, 1.0
    %v1972 = vadd.f32 %v1900, 1.0
    %v1973 = vadd.f32 %v1902, 1.0
    %v1974 = vadd.f32 %v1904, 1.0
    %v1975 = vadd.f32 %v1906, 1.0
    %v1976 = vadd.f32 %v1908, 1.0
    %v1977 = vadd.f32 %v1910, 1.0
    %v1978 = vadd.f32 %v1912, 1.0
    %v1979 = vadd.f32 %v1914, 1.0
    %v1980 = vadd.f32 %v1916, 1.0
    %v1981 = vadd.f32 %v1918, 1.0
    %v1982 = vadd.f32 %v1920, 1.0
    %v1983 = vadd.f32 %v1922, 1.0
    %v1984 = vadd.f32 %v1924, 1.0
    %v1985 = vadd.f32 %v1926, 1.0
    %v1986 = vadd.f32 %v1928, 1.0
    %v1987 = vadd.f32 %v1930, 1.0
    %v1988 = vadd.f32 %v1932, 1.0
    %v1989 = vadd.f32 %v1934, 1.0
    %v1990 = vadd.f32 %v1936, 1.0
    %v1991 = vadd.f32 %v1938, 1.0
    %v1992 = vadd.f32 %v1940, 1.0
    %v1993 = vadd.f32 %v1942, 1.0
    %v1994 = vadd.f32 %v1944, 1.0
    %v1995 = vadd.f32 %v1946, 1.0
    %v1996 = vadd.f32 %v1948, 1.0
    %v1997 = vadd.f32 %v1950, 1.0
    %v1998 = vadd.f32 %v1952, 1.0
    %v1999 = vadd.f32 %v1954, 1.0
    %v2000 = vadd.f32 %v1956, 1.0
    %v2001 = vadd.f32 %v1958, 1.0
    %v2002 = vadd.f32 %v1960, 1.0
    %v2003 = vadd.f32 %v1962, 1.0
    %v2004 = vadd.f32 %v1964, 1.0
    %v2005 = vadd.f32 %v1966, 1.0
    %v2006 = vadd.f32 %v1968, 1.0
    %v2007 = vrcp.pop %v1969
    %v2008 = vmul.f32 %v1969, %v2007
    %v2009 = vsub.f32 1.0, %v2008
    %v2010 = vmul.f32 %v2007, %v2009
    %v2011 = vadd.f32 %v2007, %v2010
    %vm2012 = vweird.f32 %v1969
    %vm2013 = vweird.f32 %v2007
    %vm2014 = vmor %vm2012, %vm2013
    %v2015 = vsel %vm2014, %v2007, %v2011
    %v2016 = vand.u32 2147483647, %v1969
    %vm2017 = vcmp.eq.f32.partialorder %v2016, 8.507059e+37
    %v2018 = vand.u32 %v1969, 2147483648
    %v2019 = vor.u32 1.1754944e-38, %v2018
    %v2020 = vsel %vm2017, %v2019, %v2015
    %v2021 = vmul.f32 1.0, %v2020
    %v2022 = vrcp.pop %v1970
    %v2023 = vmul.f32 %v1970, %v2022
    %v2024 = vsub.f32 1.0, %v2023
    %v2025 = vmul.f32 %v2022, %v2024
    %v2026 = vadd.f32 %v2022, %v2025
    %vm2027 = vweird.f32 %v1970
    %vm2028 = vweird.f32 %v2022
    %vm2029 = vmor %vm2027, %vm2028
    %v2030 = vsel %vm2029, %v2022, %v2026
    %v2031 = vand.u32 2147483647, %v1970
    %vm2032 = vcmp.eq.f32.partialorder %v2031, 8.507059e+37
    %v2033 = vand.u32 %v1970, 2147483648
    %v2034 = vor.u32 1.1754944e-38, %v2033
    %v2035 = vsel %vm2032, %v2034, %v2030
    %v2036 = vmul.f32 1.0, %v2035
    %v2037 = vrcp.pop %v1971
    %v2038 = vmul.f32 %v1971, %v2037
    %v2039 = vsub.f32 1.0, %v2038
    %v2040 = vmul.f32 %v2037, %v2039
    %v2041 = vadd.f32 %v2037, %v2040
    %vm2042 = vweird.f32 %v1971
    %vm2043 = vweird.f32 %v2037
    %vm2044 = vmor %vm2042, %vm2043
    %v2045 = vsel %vm2044, %v2037, %v2041
    %v2046 = vand.u32 2147483647, %v1971
    %vm2047 = vcmp.eq.f32.partialorder %v2046, 8.507059e+37
    %v2048 = vand.u32 %v1971, 2147483648
    %v2049 = vor.u32 1.1754944e-38, %v2048
    %v2050 = vsel %vm2047, %v2049, %v2045
    %v2051 = vmul.f32 1.0, %v2050
    %v2052 = vrcp.pop %v1972
    %v2053 = vmul.f32 %v1972, %v2052
    %v2054 = vsub.f32 1.0, %v2053
    %v2055 = vmul.f32 %v2052, %v2054
    %v2056 = vadd.f32 %v2052, %v2055
    %vm2057 = vweird.f32 %v1972
    %vm2058 = vweird.f32 %v2052
    %vm2059 = vmor %vm2057, %vm2058
    %v2060 = vsel %vm2059, %v2052, %v2056
    %v2061 = vand.u32 2147483647, %v1972
    %vm2062 = vcmp.eq.f32.partialorder %v2061, 8.507059e+37
    %v2063 = vand.u32 %v1972, 2147483648
    %v2064 = vor.u32 1.1754944e-38, %v2063
    %v2065 = vsel %vm2062, %v2064, %v2060
    %v2066 = vmul.f32 1.0, %v2065
    %v2067 = vrcp.pop %v1973
    %v2068 = vmul.f32 %v1973, %v2067
    %v2069 = vsub.f32 1.0, %v2068
    %v2070 = vmul.f32 %v2067, %v2069
    %v2071 = vadd.f32 %v2067, %v2070
    %vm2072 = vweird.f32 %v1973
    %vm2073 = vweird.f32 %v2067
    %vm2074 = vmor %vm2072, %vm2073
    %v2075 = vsel %vm2074, %v2067, %v2071
    %v2076 = vand.u32 2147483647, %v1973
    %vm2077 = vcmp.eq.f32.partialorder %v2076, 8.507059e+37
    %v2078 = vand.u32 %v1973, 2147483648
    %v2079 = vor.u32 1.1754944e-38, %v2078
    %v2080 = vsel %vm2077, %v2079, %v2075
    %v2081 = vmul.f32 1.0, %v2080
    %v2082 = vrcp.pop %v1974
    %v2083 = vmul.f32 %v1974, %v2082
    %v2084 = vsub.f32 1.0, %v2083
    %v2085 = vmul.f32 %v2082, %v2084
    %v2086 = vadd.f32 %v2082, %v2085
    %vm2087 = vweird.f32 %v1974
    %vm2088 = vweird.f32 %v2082
    %vm2089 = vmor %vm2087, %vm2088
    %v2090 = vsel %vm2089, %v2082, %v2086
    %v2091 = vand.u32 2147483647, %v1974
    %vm2092 = vcmp.eq.f32.partialorder %v2091, 8.507059e+37
    %v2093 = vand.u32 %v1974, 2147483648
    %v2094 = vor.u32 1.1754944e-38, %v2093
    %v2095 = vsel %vm2092, %v2094, %v2090
    %v2096 = vmul.f32 1.0, %v2095
    %v2097 = vrcp.pop %v1975
    %v2098 = vmul.f32 %v1975, %v2097
    %v2099 = vsub.f32 1.0, %v2098
    %v2100 = vmul.f32 %v2097, %v2099
    %v2101 = vadd.f32 %v2097, %v2100
    %vm2102 = vweird.f32 %v1975
    %vm2103 = vweird.f32 %v2097
    %vm2104 = vmor %vm2102, %vm2103
    %v2105 = vsel %vm2104, %v2097, %v2101
    %v2106 = vand.u32 2147483647, %v1975
    %vm2107 = vcmp.eq.f32.partialorder %v2106, 8.507059e+37
    %v2108 = vand.u32 %v1975, 2147483648
    %v2109 = vor.u32 1.1754944e-38, %v2108
    %v2110 = vsel %vm2107, %v2109, %v2105
    %v2111 = vmul.f32 1.0, %v2110
    %v2112 = vrcp.pop %v1976
    %v2113 = vmul.f32 %v1976, %v2112
    %v2114 = vsub.f32 1.0, %v2113
    %v2115 = vmul.f32 %v2112, %v2114
    %v2116 = vadd.f32 %v2112, %v2115
    %vm2117 = vweird.f32 %v1976
    %vm2118 = vweird.f32 %v2112
    %vm2119 = vmor %vm2117, %vm2118
    %v2120 = vsel %vm2119, %v2112, %v2116
    %v2121 = vand.u32 2147483647, %v1976
    %vm2122 = vcmp.eq.f32.partialorder %v2121, 8.507059e+37
    %v2123 = vand.u32 %v1976, 2147483648
    %v2124 = vor.u32 1.1754944e-38, %v2123
    %v2125 = vsel %vm2122, %v2124, %v2120
    %v2126 = vmul.f32 1.0, %v2125
    %v2127 = vrcp.pop %v1977
    %v2128 = vmul.f32 %v1977, %v2127
    %v2129 = vsub.f32 1.0, %v2128
    %v2130 = vmul.f32 %v2127, %v2129
    %v2131 = vadd.f32 %v2127, %v2130
    %vm2132 = vweird.f32 %v1977
    %vm2133 = vweird.f32 %v2127
    %vm2134 = vmor %vm2132, %vm2133
    %v2135 = vsel %vm2134, %v2127, %v2131
    %v2136 = vand.u32 2147483647, %v1977
    %vm2137 = vcmp.eq.f32.partialorder %v2136, 8.507059e+37
    %v2138 = vand.u32 %v1977, 2147483648
    %v2139 = vor.u32 1.1754944e-38, %v2138
    %v2140 = vsel %vm2137, %v2139, %v2135
    %v2141 = vmul.f32 1.0, %v2140
    %v2142 = vrcp.pop %v1978
    %v2143 = vmul.f32 %v1978, %v2142
    %v2144 = vsub.f32 1.0, %v2143
    %v2145 = vmul.f32 %v2142, %v2144
    %v2146 = vadd.f32 %v2142, %v2145
    %vm2147 = vweird.f32 %v1978
    %vm2148 = vweird.f32 %v2142
    %vm2149 = vmor %vm2147, %vm2148
    %v2150 = vsel %vm2149, %v2142, %v2146
    %v2151 = vand.u32 2147483647, %v1978
    %vm2152 = vcmp.eq.f32.partialorder %v2151, 8.507059e+37
    %v2153 = vand.u32 %v1978, 2147483648
    %v2154 = vor.u32 1.1754944e-38, %v2153
    %v2155 = vsel %vm2152, %v2154, %v2150
    %v2156 = vmul.f32 1.0, %v2155
    %v2157 = vrcp.pop %v1979
    %v2158 = vmul.f32 %v1979, %v2157
    %v2159 = vsub.f32 1.0, %v2158
    %v2160 = vmul.f32 %v2157, %v2159
    %v2161 = vadd.f32 %v2157, %v2160
    %vm2162 = vweird.f32 %v1979
    %vm2163 = vweird.f32 %v2157
    %vm2164 = vmor %vm2162, %vm2163
    %v2165 = vsel %vm2164, %v2157, %v2161
    %v2166 = vand.u32 2147483647, %v1979
    %vm2167 = vcmp.eq.f32.partialorder %v2166, 8.507059e+37
    %v2168 = vand.u32 %v1979, 2147483648
    %v2169 = vor.u32 1.1754944e-38, %v2168
    %v2170 = vsel %vm2167, %v2169, %v2165
    %v2171 = vmul.f32 1.0, %v2170
    %v2172 = vrcp.pop %v1980
    %v2173 = vmul.f32 %v1980, %v2172
    %v2174 = vsub.f32 1.0, %v2173
    %v2175 = vmul.f32 %v2172, %v2174
    %v2176 = vadd.f32 %v2172, %v2175
    %vm2177 = vweird.f32 %v1980
    %vm2178 = vweird.f32 %v2172
    %vm2179 = vmor %vm2177, %vm2178
    %v2180 = vsel %vm2179, %v2172, %v2176
    %v2181 = vand.u32 2147483647, %v1980
    %vm2182 = vcmp.eq.f32.partialorder %v2181, 8.507059e+37
    %v2183 = vand.u32 %v1980, 2147483648
    %v2184 = vor.u32 1.1754944e-38, %v2183
    %v2185 = vsel %vm2182, %v2184, %v2180
    %v2186 = vmul.f32 1.0, %v2185
    %v2187 = vrcp.pop %v1981
    %v2188 = vmul.f32 %v1981, %v2187
    %v2189 = vsub.f32 1.0, %v2188
    %v2190 = vmul.f32 %v2187, %v2189
    %v2191 = vadd.f32 %v2187, %v2190
    %vm2192 = vweird.f32 %v1981
    %vm2193 = vweird.f32 %v2187
    %vm2194 = vmor %vm2192, %vm2193
    %v2195 = vsel %vm2194, %v2187, %v2191
    %v2196 = vand.u32 2147483647, %v1981
    %vm2197 = vcmp.eq.f32.partialorder %v2196, 8.507059e+37
    %v2198 = vand.u32 %v1981, 2147483648
    %v2199 = vor.u32 1.1754944e-38, %v2198
    %v2200 = vsel %vm2197, %v2199, %v2195
    %v2201 = vmul.f32 1.0, %v2200
    %v2202 = vrcp.pop %v1982
    %v2203 = vmul.f32 %v1982, %v2202
    %v2204 = vsub.f32 1.0, %v2203
    %v2205 = vmul.f32 %v2202, %v2204
    %v2206 = vadd.f32 %v2202, %v2205
    %vm2207 = vweird.f32 %v1982
    %vm2208 = vweird.f32 %v2202
    %vm2209 = vmor %vm2207, %vm2208
    %v2210 = vsel %vm2209, %v2202, %v2206
    %v2211 = vand.u32 2147483647, %v1982
    %vm2212 = vcmp.eq.f32.partialorder %v2211, 8.507059e+37
    %v2213 = vand.u32 %v1982, 2147483648
    %v2214 = vor.u32 1.1754944e-38, %v2213
    %v2215 = vsel %vm2212, %v2214, %v2210
    %v2216 = vmul.f32 1.0, %v2215
    %v2217 = vrcp.pop %v1983
    %v2218 = vmul.f32 %v1983, %v2217
    %v2219 = vsub.f32 1.0, %v2218
    %v2220 = vmul.f32 %v2217, %v2219
    %v2221 = vadd.f32 %v2217, %v2220
    %vm2222 = vweird.f32 %v1983
    %vm2223 = vweird.f32 %v2217
    %vm2224 = vmor %vm2222, %vm2223
    %v2225 = vsel %vm2224, %v2217, %v2221
    %v2226 = vand.u32 2147483647, %v1983
    %vm2227 = vcmp.eq.f32.partialorder %v2226, 8.507059e+37
    %v2228 = vand.u32 %v1983, 2147483648
    %v2229 = vor.u32 1.1754944e-38, %v2228
    %v2230 = vsel %vm2227, %v2229, %v2225
    %v2231 = vmul.f32 1.0, %v2230
    %v2232 = vrcp.pop %v1984
    %v2233 = vmul.f32 %v1984, %v2232
    %v2234 = vsub.f32 1.0, %v2233
    %v2235 = vmul.f32 %v2232, %v2234
    %v2236 = vadd.f32 %v2232, %v2235
    %vm2237 = vweird.f32 %v1984
    %vm2238 = vweird.f32 %v2232
    %vm2239 = vmor %vm2237, %vm2238
    %v2240 = vsel %vm2239, %v2232, %v2236
    %v2241 = vand.u32 2147483647, %v1984
    %vm2242 = vcmp.eq.f32.partialorder %v2241, 8.507059e+37
    %v2243 = vand.u32 %v1984, 2147483648
    %v2244 = vor.u32 1.1754944e-38, %v2243
    %v2245 = vsel %vm2242, %v2244, %v2240
    %v2246 = vmul.f32 1.0, %v2245
    %v2247 = vrcp.pop %v1985
    %v2248 = vmul.f32 %v1985, %v2247
    %v2249 = vsub.f32 1.0, %v2248
    %v2250 = vmul.f32 %v2247, %v2249
    %v2251 = vadd.f32 %v2247, %v2250
    %vm2252 = vweird.f32 %v1985
    %vm2253 = vweird.f32 %v2247
    %vm2254 = vmor %vm2252, %vm2253
    %v2255 = vsel %vm2254, %v2247, %v2251
    %v2256 = vand.u32 2147483647, %v1985
    %vm2257 = vcmp.eq.f32.partialorder %v2256, 8.507059e+37
    %v2258 = vand.u32 %v1985, 2147483648
    %v2259 = vor.u32 1.1754944e-38, %v2258
    %v2260 = vsel %vm2257, %v2259, %v2255
    %v2261 = vmul.f32 1.0, %v2260
    %v2262 = vrcp.pop %v1986
    %v2263 = vmul.f32 %v1986, %v2262
    %v2264 = vsub.f32 1.0, %v2263
    %v2265 = vmul.f32 %v2262, %v2264
    %v2266 = vadd.f32 %v2262, %v2265
    %vm2267 = vweird.f32 %v1986
    %vm2268 = vweird.f32 %v2262
    %vm2269 = vmor %vm2267, %vm2268
    %v2270 = vsel %vm2269, %v2262, %v2266
    %v2271 = vand.u32 2147483647, %v1986
    %vm2272 = vcmp.eq.f32.partialorder %v2271, 8.507059e+37
    %v2273 = vand.u32 %v1986, 2147483648
    %v2274 = vor.u32 1.1754944e-38, %v2273
    %v2275 = vsel %vm2272, %v2274, %v2270
    %v2276 = vmul.f32 1.0, %v2275
    %v2277 = vrcp.pop %v1987
    %v2278 = vmul.f32 %v1987, %v2277
    %v2279 = vsub.f32 1.0, %v2278
    %v2280 = vmul.f32 %v2277, %v2279
    %v2281 = vadd.f32 %v2277, %v2280
    %vm2282 = vweird.f32 %v1987
    %vm2283 = vweird.f32 %v2277
    %vm2284 = vmor %vm2282, %vm2283
    %v2285 = vsel %vm2284, %v2277, %v2281
    %v2286 = vand.u32 2147483647, %v1987
    %vm2287 = vcmp.eq.f32.partialorder %v2286, 8.507059e+37
    %v2288 = vand.u32 %v1987, 2147483648
    %v2289 = vor.u32 1.1754944e-38, %v2288
    %v2290 = vsel %vm2287, %v2289, %v2285
    %v2291 = vmul.f32 1.0, %v2290
    %v2292 = vrcp.pop %v1988
    %v2293 = vmul.f32 %v1988, %v2292
    %v2294 = vsub.f32 1.0, %v2293
    %v2295 = vmul.f32 %v2292, %v2294
    %v2296 = vadd.f32 %v2292, %v2295
    %vm2297 = vweird.f32 %v1988
    %vm2298 = vweird.f32 %v2292
    %vm2299 = vmor %vm2297, %vm2298
    %v2300 = vsel %vm2299, %v2292, %v2296
    %v2301 = vand.u32 2147483647, %v1988
    %vm2302 = vcmp.eq.f32.partialorder %v2301, 8.507059e+37
    %v2303 = vand.u32 %v1988, 2147483648
    %v2304 = vor.u32 1.1754944e-38, %v2303
    %v2305 = vsel %vm2302, %v2304, %v2300
    %v2306 = vmul.f32 1.0, %v2305
    %v2307 = vrcp.pop %v1989
    %v2308 = vmul.f32 %v1989, %v2307
    %v2309 = vsub.f32 1.0, %v2308
    %v2310 = vmul.f32 %v2307, %v2309
    %v2311 = vadd.f32 %v2307, %v2310
    %vm2312 = vweird.f32 %v1989
    %vm2313 = vweird.f32 %v2307
    %vm2314 = vmor %vm2312, %vm2313
    %v2315 = vsel %vm2314, %v2307, %v2311
    %v2316 = vand.u32 2147483647, %v1989
    %vm2317 = vcmp.eq.f32.partialorder %v2316, 8.507059e+37
    %v2318 = vand.u32 %v1989, 2147483648
    %v2319 = vor.u32 1.1754944e-38, %v2318
    %v2320 = vsel %vm2317, %v2319, %v2315
    %v2321 = vmul.f32 1.0, %v2320
    %v2322 = vrcp.pop %v1990
    %v2323 = vmul.f32 %v1990, %v2322
    %v2324 = vsub.f32 1.0, %v2323
    %v2325 = vmul.f32 %v2322, %v2324
    %v2326 = vadd.f32 %v2322, %v2325
    %vm2327 = vweird.f32 %v1990
    %vm2328 = vweird.f32 %v2322
    %vm2329 = vmor %vm2327, %vm2328
    %v2330 = vsel %vm2329, %v2322, %v2326
    %v2331 = vand.u32 2147483647, %v1990
    %vm2332 = vcmp.eq.f32.partialorder %v2331, 8.507059e+37
    %v2333 = vand.u32 %v1990, 2147483648
    %v2334 = vor.u32 1.1754944e-38, %v2333
    %v2335 = vsel %vm2332, %v2334, %v2330
    %v2336 = vmul.f32 1.0, %v2335
    %v2337 = vrcp.pop %v1991
    %v2338 = vmul.f32 %v1991, %v2337
    %v2339 = vsub.f32 1.0, %v2338
    %v2340 = vmul.f32 %v2337, %v2339
    %v2341 = vadd.f32 %v2337, %v2340
    %vm2342 = vweird.f32 %v1991
    %vm2343 = vweird.f32 %v2337
    %vm2344 = vmor %vm2342, %vm2343
    %v2345 = vsel %vm2344, %v2337, %v2341
    %v2346 = vand.u32 2147483647, %v1991
    %vm2347 = vcmp.eq.f32.partialorder %v2346, 8.507059e+37
    %v2348 = vand.u32 %v1991, 2147483648
    %v2349 = vor.u32 1.1754944e-38, %v2348
    %v2350 = vsel %vm2347, %v2349, %v2345
    %v2351 = vmul.f32 1.0, %v2350
    %v2352 = vrcp.pop %v1992
    %v2353 = vmul.f32 %v1992, %v2352
    %v2354 = vsub.f32 1.0, %v2353
    %v2355 = vmul.f32 %v2352, %v2354
    %v2356 = vadd.f32 %v2352, %v2355
    %vm2357 = vweird.f32 %v1992
    %vm2358 = vweird.f32 %v2352
    %vm2359 = vmor %vm2357, %vm2358
    %v2360 = vsel %vm2359, %v2352, %v2356
    %v2361 = vand.u32 2147483647, %v1992
    %vm2362 = vcmp.eq.f32.partialorder %v2361, 8.507059e+37
    %v2363 = vand.u32 %v1992, 2147483648
    %v2364 = vor.u32 1.1754944e-38, %v2363
    %v2365 = vsel %vm2362, %v2364, %v2360
    %v2366 = vmul.f32 1.0, %v2365
    %v2367 = vrcp.pop %v1993
    %v2368 = vmul.f32 %v1993, %v2367
    %v2369 = vsub.f32 1.0, %v2368
    %v2370 = vmul.f32 %v2367, %v2369
    %v2371 = vadd.f32 %v2367, %v2370
    %vm2372 = vweird.f32 %v1993
    %vm2373 = vweird.f32 %v2367
    %vm2374 = vmor %vm2372, %vm2373
    %v2375 = vsel %vm2374, %v2367, %v2371
    %v2376 = vand.u32 2147483647, %v1993
    %vm2377 = vcmp.eq.f32.partialorder %v2376, 8.507059e+37
    %v2378 = vand.u32 %v1993, 2147483648
    %v2379 = vor.u32 1.1754944e-38, %v2378
    %v2380 = vsel %vm2377, %v2379, %v2375
    %v2381 = vmul.f32 1.0, %v2380
    %v2382 = vrcp.pop %v1994
    %v2383 = vmul.f32 %v1994, %v2382
    %v2384 = vsub.f32 1.0, %v2383
    %v2385 = vmul.f32 %v2382, %v2384
    %v2386 = vadd.f32 %v2382, %v2385
    %vm2387 = vweird.f32 %v1994
    %vm2388 = vweird.f32 %v2382
    %vm2389 = vmor %vm2387, %vm2388
    %v2390 = vsel %vm2389, %v2382, %v2386
    %v2391 = vand.u32 2147483647, %v1994
    %vm2392 = vcmp.eq.f32.partialorder %v2391, 8.507059e+37
    %v2393 = vand.u32 %v1994, 2147483648
    %v2394 = vor.u32 1.1754944e-38, %v2393
    %v2395 = vsel %vm2392, %v2394, %v2390
    %v2396 = vmul.f32 1.0, %v2395
    %v2397 = vrcp.pop %v1995
    %v2398 = vmul.f32 %v1995, %v2397
    %v2399 = vsub.f32 1.0, %v2398
    %v2400 = vmul.f32 %v2397, %v2399
    %v2401 = vadd.f32 %v2397, %v2400
    %vm2402 = vweird.f32 %v1995
    %vm2403 = vweird.f32 %v2397
    %vm2404 = vmor %vm2402, %vm2403
    %v2405 = vsel %vm2404, %v2397, %v2401
    %v2406 = vand.u32 2147483647, %v1995
    %vm2407 = vcmp.eq.f32.partialorder %v2406, 8.507059e+37
    %v2408 = vand.u32 %v1995, 2147483648
    %v2409 = vor.u32 1.1754944e-38, %v2408
    %v2410 = vsel %vm2407, %v2409, %v2405
    %v2411 = vmul.f32 1.0, %v2410
    %v2412 = vrcp.pop %v1996
    %v2413 = vmul.f32 %v1996, %v2412
    %v2414 = vsub.f32 1.0, %v2413
    %v2415 = vmul.f32 %v2412, %v2414
    %v2416 = vadd.f32 %v2412, %v2415
    %vm2417 = vweird.f32 %v1996
    %vm2418 = vweird.f32 %v2412
    %vm2419 = vmor %vm2417, %vm2418
    %v2420 = vsel %vm2419, %v2412, %v2416
    %v2421 = vand.u32 2147483647, %v1996
    %vm2422 = vcmp.eq.f32.partialorder %v2421, 8.507059e+37
    %v2423 = vand.u32 %v1996, 2147483648
    %v2424 = vor.u32 1.1754944e-38, %v2423
    %v2425 = vsel %vm2422, %v2424, %v2420
    %v2426 = vmul.f32 1.0, %v2425
    %v2427 = vrcp.pop %v1997
    %v2428 = vmul.f32 %v1997, %v2427
    %v2429 = vsub.f32 1.0, %v2428
    %v2430 = vmul.f32 %v2427, %v2429
    %v2431 = vadd.f32 %v2427, %v2430
    %vm2432 = vweird.f32 %v1997
    %vm2433 = vweird.f32 %v2427
    %vm2434 = vmor %vm2432, %vm2433
    %v2435 = vsel %vm2434, %v2427, %v2431
    %v2436 = vand.u32 2147483647, %v1997
    %vm2437 = vcmp.eq.f32.partialorder %v2436, 8.507059e+37
    %v2438 = vand.u32 %v1997, 2147483648
    %v2439 = vor.u32 1.1754944e-38, %v2438
    %v2440 = vsel %vm2437, %v2439, %v2435
    %v2441 = vmul.f32 1.0, %v2440
    %v2442 = vrcp.pop %v1998
    %v2443 = vmul.f32 %v1998, %v2442
    %v2444 = vsub.f32 1.0, %v2443
    %v2445 = vmul.f32 %v2442, %v2444
    %v2446 = vadd.f32 %v2442, %v2445
    %vm2447 = vweird.f32 %v1998
    %vm2448 = vweird.f32 %v2442
    %vm2449 = vmor %vm2447, %vm2448
    %v2450 = vsel %vm2449, %v2442, %v2446
    %v2451 = vand.u32 2147483647, %v1998
    %vm2452 = vcmp.eq.f32.partialorder %v2451, 8.507059e+37
    %v2453 = vand.u32 %v1998, 2147483648
    %v2454 = vor.u32 1.1754944e-38, %v2453
    %v2455 = vsel %vm2452, %v2454, %v2450
    %v2456 = vmul.f32 1.0, %v2455
    %v2457 = vrcp.pop %v1999
    %v2458 = vmul.f32 %v1999, %v2457
    %v2459 = vsub.f32 1.0, %v2458
    %v2460 = vmul.f32 %v2457, %v2459
    %v2461 = vadd.f32 %v2457, %v2460
    %vm2462 = vweird.f32 %v1999
    %vm2463 = vweird.f32 %v2457
    %vm2464 = vmor %vm2462, %vm2463
    %v2465 = vsel %vm2464, %v2457, %v2461
    %v2466 = vand.u32 2147483647, %v1999
    %vm2467 = vcmp.eq.f32.partialorder %v2466, 8.507059e+37
    %v2468 = vand.u32 %v1999, 2147483648
    %v2469 = vor.u32 1.1754944e-38, %v2468
    %v2470 = vsel %vm2467, %v2469, %v2465
    %v2471 = vmul.f32 1.0, %v2470
    %v2472 = vrcp.pop %v2000
    %v2473 = vmul.f32 %v2000, %v2472
    %v2474 = vsub.f32 1.0, %v2473
    %v2475 = vmul.f32 %v2472, %v2474
    %v2476 = vadd.f32 %v2472, %v2475
    %vm2477 = vweird.f32 %v2000
    %vm2478 = vweird.f32 %v2472
    %vm2479 = vmor %vm2477, %vm2478
    %v2480 = vsel %vm2479, %v2472, %v2476
    %v2481 = vand.u32 2147483647, %v2000
    %vm2482 = vcmp.eq.f32.partialorder %v2481, 8.507059e+37
    %v2483 = vand.u32 %v2000, 2147483648
    %v2484 = vor.u32 1.1754944e-38, %v2483
    %v2485 = vsel %vm2482, %v2484, %v2480
    %v2486 = vmul.f32 1.0, %v2485
    %v2487 = vrcp.pop %v2001
    %v2488 = vmul.f32 %v2001, %v2487
    %v2489 = vsub.f32 1.0, %v2488
    %v2490 = vmul.f32 %v2487, %v2489
    %v2491 = vadd.f32 %v2487, %v2490
    %vm2492 = vweird.f32 %v2001
    %vm2493 = vweird.f32 %v2487
    %vm2494 = vmor %vm2492, %vm2493
    %v2495 = vsel %vm2494, %v2487, %v2491
    %v2496 = vand.u32 2147483647, %v2001
    %vm2497 = vcmp.eq.f32.partialorder %v2496, 8.507059e+37
    %v2498 = vand.u32 %v2001, 2147483648
    %v2499 = vor.u32 1.1754944e-38, %v2498
    %v2500 = vsel %vm2497, %v2499, %v2495
    %v2501 = vmul.f32 1.0, %v2500
    %v2502 = vrcp.pop %v2002
    %v2503 = vmul.f32 %v2002, %v2502
    %v2504 = vsub.f32 1.0, %v2503
    %v2505 = vmul.f32 %v2502, %v2504
    %v2506 = vadd.f32 %v2502, %v2505
    %vm2507 = vweird.f32 %v2002
    %vm2508 = vweird.f32 %v2502
    %vm2509 = vmor %vm2507, %vm2508
    %v2510 = vsel %vm2509, %v2502, %v2506
    %v2511 = vand.u32 2147483647, %v2002
    %vm2512 = vcmp.eq.f32.partialorder %v2511, 8.507059e+37
    %v2513 = vand.u32 %v2002, 2147483648
    %v2514 = vor.u32 1.1754944e-38, %v2513
    %v2515 = vsel %vm2512, %v2514, %v2510
    %v2516 = vmul.f32 1.0, %v2515
    %v2517 = vrcp.pop %v2003
    %v2518 = vmul.f32 %v2003, %v2517
    %v2519 = vsub.f32 1.0, %v2518
    %v2520 = vmul.f32 %v2517, %v2519
    %v2521 = vadd.f32 %v2517, %v2520
    %vm2522 = vweird.f32 %v2003
    %vm2523 = vweird.f32 %v2517
    %vm2524 = vmor %vm2522, %vm2523
    %v2525 = vsel %vm2524, %v2517, %v2521
    %v2526 = vand.u32 2147483647, %v2003
    %vm2527 = vcmp.eq.f32.partialorder %v2526, 8.507059e+37
    %v2528 = vand.u32 %v2003, 2147483648
    %v2529 = vor.u32 1.1754944e-38, %v2528
    %v2530 = vsel %vm2527, %v2529, %v2525
    %v2531 = vmul.f32 1.0, %v2530
    %v2532 = vrcp.pop %v2004
    %v2533 = vmul.f32 %v2004, %v2532
    %v2534 = vsub.f32 1.0, %v2533
    %v2535 = vmul.f32 %v2532, %v2534
    %v2536 = vadd.f32 %v2532, %v2535
    %vm2537 = vweird.f32 %v2004
    %vm2538 = vweird.f32 %v2532
    %vm2539 = vmor %vm2537, %vm2538
    %v2540 = vsel %vm2539, %v2532, %v2536
    %v2541 = vand.u32 2147483647, %v2004
    %vm2542 = vcmp.eq.f32.partialorder %v2541, 8.507059e+37
    %v2543 = vand.u32 %v2004, 2147483648
    %v2544 = vor.u32 1.1754944e-38, %v2543
    %v2545 = vsel %vm2542, %v2544, %v2540
    %v2546 = vmul.f32 1.0, %v2545
    %v2547 = vrcp.pop %v2005
    %v2548 = vmul.f32 %v2005, %v2547
    %v2549 = vsub.f32 1.0, %v2548
    %v2550 = vmul.f32 %v2547, %v2549
    %v2551 = vadd.f32 %v2547, %v2550
    %vm2552 = vweird.f32 %v2005
    %vm2553 = vweird.f32 %v2547
    %vm2554 = vmor %vm2552, %vm2553
    %v2555 = vsel %vm2554, %v2547, %v2551
    %v2556 = vand.u32 2147483647, %v2005
    %vm2557 = vcmp.eq.f32.partialorder %v2556, 8.507059e+37
    %v2558 = vand.u32 %v2005, 2147483648
    %v2559 = vor.u32 1.1754944e-38, %v2558
    %v2560 = vsel %vm2557, %v2559, %v2555
    %v2561 = vmul.f32 1.0, %v2560
    %v2562 = vrcp.pop %v2006
    %v2563 = vmul.f32 %v2006, %v2562
    %v2564 = vsub.f32 1.0, %v2563
    %v2565 = vmul.f32 %v2562, %v2564
    %v2566 = vadd.f32 %v2562, %v2565
    %vm2567 = vweird.f32 %v2006
    %vm2568 = vweird.f32 %v2562
    %vm2569 = vmor %vm2567, %vm2568
    %v2570 = vsel %vm2569, %v2562, %v2566
    %v2571 = vand.u32 2147483647, %v2006
    %vm2572 = vcmp.eq.f32.partialorder %v2571, 8.507059e+37
    %v2573 = vand.u32 %v2006, 2147483648
    %v2574 = vor.u32 1.1754944e-38, %v2573
    %v2575 = vsel %vm2572, %v2574, %v2570
    %v2576 = vmul.f32 1.0, %v2575
    %2577 = vst [vmem:[#allocation8] sm:$0xf] 0
    %2578 = vst [vmem:[#allocation8 + $0x4] sm:$0xf] 0
    %2579 = vst [vmem:[#allocation8 + $0x8] sm:$0xf] 0
    %2580 = vst [vmem:[#allocation8 + $0xc] sm:$0xf] 0
    %2581 = vst [vmem:[#allocation8 + $0x10] sm:$0xf] 0
    %2582 = vst [vmem:[#allocation8 + $0x14] sm:$0xf] 0
    %2583 = vst [vmem:[#allocation8 + $0x18] sm:$0xf] 0
    %2584 = vst [vmem:[#allocation8 + $0x1c] sm:$0xf] 0
    %2585 = vst [vmem:[#allocation8 + $0x20] sm:$0xf] 0
    %2586 = vst [vmem:[#allocation8 + $0x24] sm:$0xf] 0
    %2587 = vst [vmem:[#allocation8 + $0x28] sm:$0xf] 0
    %2588 = vst [vmem:[#allocation8 + $0x2c] sm:$0xf] 0
    %2589 = vst [vmem:[#allocation8 + $0x30] sm:$0xf] 0
    %2590 = vst [vmem:[#allocation8 + $0x34] sm:$0xf] 0
    %2591 = vst [vmem:[#allocation8 + $0x38] sm:$0xf] 0
    %2592 = vst [vmem:[#allocation8 + $0x3c] sm:$0xf] 0
    %2593 = vst [vmem:[#allocation8 + $0x40] sm:$0xf] 0
    %2594 = vst [vmem:[#allocation8 + $0x44] sm:$0xf] 0
    %2595 = vst [vmem:[#allocation8 + $0x48] sm:$0xf] 0
    %2596 = vst [vmem:[#allocation8 + $0x4c] sm:$0xf] 0
    %2597 = vst [vmem:[#allocation8 + $0x50] sm:$0xf] 0
    %2598 = vst [vmem:[#allocation8 + $0x54] sm:$0xf] 0
    %2599 = vst [vmem:[#allocation8 + $0x58] sm:$0xf] 0
    %2600 = vst [vmem:[#allocation8 + $0x5c] sm:$0xf] 0
    %2601 = vst [vmem:[#allocation8 + $0x60] sm:$0xf] 0
    %2602 = vst [vmem:[#allocation8 + $0x64] sm:$0xf] 0
    %2603 = vst [vmem:[#allocation8 + $0x68] sm:$0xf] 0
    %2604 = vst [vmem:[#allocation8 + $0x6c] sm:$0xf] 0
    %2605 = vst [vmem:[#allocation8 + $0x70] sm:$0xf] 0
    %2606 = vst [vmem:[#allocation8 + $0x74] sm:$0xf] 0
    %2607 = vst [vmem:[#allocation8 + $0x78] sm:$0xf] 0
    %2608 = vst [vmem:[#allocation8 + $0x7c] sm:$0xf] 0
    %2609 = vst [vmem:[#allocation8 + $0x80] sm:$0xf] 0
    %2610 = vst [vmem:[#allocation8 + $0x84] sm:$0xf] 0
    %2611 = vst [vmem:[#allocation8 + $0x88] sm:$0xf] 0
    %2612 = vst [vmem:[#allocation8 + $0x8c] sm:$0xf] 0
    %2613 = vst [vmem:[#allocation8 + $0x90] sm:$0xf] 0
    %2614 = vst [vmem:[#allocation8 + $0x94] sm:$0xf] 0
    %v2615 = vpack.c.bf16 %v2021, %v2021
    %v2616 = vpack.c.bf16 %v2036, %v2036
    %v2617 = vpack.c.bf16 %v2051, %v2051
    %v2618 = vpack.c.bf16 %v2066, %v2066
    %v2619 = vpack.c.bf16 %v2081, %v2081
    %v2620 = vpack.c.bf16 %v2096, %v2096
    %v2621 = vpack.c.bf16 %v2111, %v2111
    %v2622 = vpack.c.bf16 %v2126, %v2126
    %v2623 = vpack.c.bf16 %v2141, %v2141
    %v2624 = vpack.c.bf16 %v2156, %v2156
    %v2625 = vpack.c.bf16 %v2171, %v2171
    %v2626 = vpack.c.bf16 %v2186, %v2186
    %v2627 = vpack.c.bf16 %v2201, %v2201
    %v2628 = vpack.c.bf16 %v2216, %v2216
    %v2629 = vpack.c.bf16 %v2231, %v2231
    %v2630 = vpack.c.bf16 %v2246, %v2246
    %v2631 = vpack.c.bf16 %v2261, %v2261
    %v2632 = vpack.c.bf16 %v2276, %v2276
    %v2633 = vpack.c.bf16 %v2291, %v2291
    %v2634 = vpack.c.bf16 %v2306, %v2306
    %v2635 = vpack.c.bf16 %v2321, %v2321
    %v2636 = vpack.c.bf16 %v2336, %v2336
    %v2637 = vpack.c.bf16 %v2351, %v2351
    %v2638 = vpack.c.bf16 %v2366, %v2366
    %v2639 = vpack.c.bf16 %v2381, %v2381
    %v2640 = vpack.c.bf16 %v2396, %v2396
    %v2641 = vpack.c.bf16 %v2411, %v2411
    %v2642 = vpack.c.bf16 %v2426, %v2426
    %v2643 = vpack.c.bf16 %v2441, %v2441
    %v2644 = vpack.c.bf16 %v2456, %v2456
    %v2645 = vpack.c.bf16 %v2471, %v2471
    %v2646 = vpack.c.bf16 %v2486, %v2486
    %v2647 = vpack.c.bf16 %v2501, %v2501
    %v2648 = vpack.c.bf16 %v2516, %v2516
    %v2649 = vpack.c.bf16 %v2531, %v2531
    %v2650 = vpack.c.bf16 %v2546, %v2546
    %v2651 = vpack.c.bf16 %v2561, %v2561
    %v2652 = vpack.c.bf16 %v2576, %v2576
    %vm2653 = vcmask 3072
    %2654 = vst.msk [vmem:[#allocation8] sm:$0xf] %vm2653, %v2615
    %2655 = vst.msk [vmem:[#allocation8 + $0x4] sm:$0xf] %vm2653, %v2616
    %2656 = vst.msk [vmem:[#allocation8 + $0x8] sm:$0xf] %vm2653, %v2617
    %2657 = vst.msk [vmem:[#allocation8 + $0xc] sm:$0xf] %vm2653, %v2618
    %2658 = vst.msk [vmem:[#allocation8 + $0x10] sm:$0xf] %vm2653, %v2619
    %2659 = vst.msk [vmem:[#allocation8 + $0x14] sm:$0xf] %vm2653, %v2620
    %2660 = vst.msk [vmem:[#allocation8 + $0x18] sm:$0xf] %vm2653, %v2621
    %2661 = vst.msk [vmem:[#allocation8 + $0x1c] sm:$0xf] %vm2653, %v2622
    %2662 = vst.msk [vmem:[#allocation8 + $0x20] sm:$0xf] %vm2653, %v2623
    %2663 = vst.msk [vmem:[#allocation8 + $0x24] sm:$0xf] %vm2653, %v2624
    %2664 = vst.msk [vmem:[#allocation8 + $0x28] sm:$0xf] %vm2653, %v2625
    %2665 = vst.msk [vmem:[#allocation8 + $0x2c] sm:$0xf] %vm2653, %v2626
    %2666 = vst.msk [vmem:[#allocation8 + $0x30] sm:$0xf] %vm2653, %v2627
    %2667 = vst.msk [vmem:[#allocation8 + $0x34] sm:$0xf] %vm2653, %v2628
    %2668 = vst.msk [vmem:[#allocation8 + $0x38] sm:$0xf] %vm2653, %v2629
    %2669 = vst.msk [vmem:[#allocation8 + $0x3c] sm:$0xf] %vm2653, %v2630
    %2670 = vst.msk [vmem:[#allocation8 + $0x40] sm:$0xf] %vm2653, %v2631
    %2671 = vst.msk [vmem:[#allocation8 + $0x44] sm:$0xf] %vm2653, %v2632
    %2672 = vst.msk [vmem:[#allocation8 + $0x48] sm:$0xf] %vm2653, %v2633
    %2673 = vst.msk [vmem:[#allocation8 + $0x4c] sm:$0xf] %vm2653, %v2634
    %2674 = vst.msk [vmem:[#allocation8 + $0x50] sm:$0xf] %vm2653, %v2635
    %2675 = vst.msk [vmem:[#allocation8 + $0x54] sm:$0xf] %vm2653, %v2636
    %2676 = vst.msk [vmem:[#allocation8 + $0x58] sm:$0xf] %vm2653, %v2637
    %2677 = vst.msk [vmem:[#allocation8 + $0x5c] sm:$0xf] %vm2653, %v2638
    %2678 = vst.msk [vmem:[#allocation8 + $0x60] sm:$0xf] %vm2653, %v2639
    %2679 = vst.msk [vmem:[#allocation8 + $0x64] sm:$0xf] %vm2653, %v2640
    %2680 = vst.msk [vmem:[#allocation8 + $0x68] sm:$0xf] %vm2653, %v2641
    %2681 = vst.msk [vmem:[#allocation8 + $0x6c] sm:$0xf] %vm2653, %v2642
    %2682 = vst.msk [vmem:[#allocation8 + $0x70] sm:$0xf] %vm2653, %v2643
    %2683 = vst.msk [vmem:[#allocation8 + $0x74] sm:$0xf] %vm2653, %v2644
    %2684 = vst.msk [vmem:[#allocation8 + $0x78] sm:$0xf] %vm2653, %v2645
    %2685 = vst.msk [vmem:[#allocation8 + $0x7c] sm:$0xf] %vm2653, %v2646
    %2686 = vst.msk [vmem:[#allocation8 + $0x80] sm:$0xf] %vm2653, %v2647
    %2687 = vst.msk [vmem:[#allocation8 + $0x84] sm:$0xf] %vm2653, %v2648
    %2688 = vst.msk [vmem:[#allocation8 + $0x88] sm:$0xf] %vm2653, %v2649
    %2689 = vst.msk [vmem:[#allocation8 + $0x8c] sm:$0xf] %vm2653, %v2650
    %2690 = vst.msk [vmem:[#allocation8 + $0x90] sm:$0xf] %vm2653, %v2651
    %2691 = vst.msk [vmem:[#allocation8 + $0x94] sm:$0xf] %vm2653, %v2652
    %v2692 = vpack.c.bf16 %v1413, %v1413
    %v2693 = vpack.c.bf16 %v1415, %v1415
    %v2694 = vpack.c.bf16 %v1418, %v1418
    %v2695 = vpack.c.bf16 %v1420, %v1420
    %v2696 = vpack.c.bf16 %v1423, %v1423
    %v2697 = vpack.c.bf16 %v1425, %v1425
    %v2698 = vpack.c.bf16 %v1428, %v1428
    %v2699 = vpack.c.bf16 %v1430, %v1430
    %v2700 = vpack.c.bf16 %v1433, %v1433
    %v2701 = vpack.c.bf16 %v1435, %v1435
    %v2702 = vpack.c.bf16 %v1438, %v1438
    %v2703 = vpack.c.bf16 %v1440, %v1440
    %v2704 = vpack.c.bf16 %v1443, %v1443
    %v2705 = vpack.c.bf16 %v1445, %v1445
    %v2706 = vpack.c.bf16 %v1448, %v1448
    %v2707 = vpack.c.bf16 %v1450, %v1450
    %v2708 = vpack.c.bf16 %v1453, %v1453
    %v2709 = vpack.c.bf16 %v1455, %v1455
    %v2710 = vpack.c.bf16 %v1458, %v1458
    %v2711 = vpack.c.bf16 %v1460, %v1460
    %v2712 = vpack.c.bf16 %v1463, %v1463
    %v2713 = vpack.c.bf16 %v1465, %v1465
    %v2714 = vpack.c.bf16 %v1468, %v1468
    %v2715 = vpack.c.bf16 %v1470, %v1470
    %v2716 = vpack.c.bf16 %v1473, %v1473
    %v2717 = vpack.c.bf16 %v1475, %v1475
    %v2718 = vpack.c.bf16 %v1478, %v1478
    %v2719 = vpack.c.bf16 %v1480, %v1480
    %v2720 = vpack.c.bf16 %v1483, %v1483
    %v2721 = vpack.c.bf16 %v1485, %v1485
    %v2722 = vpack.c.bf16 %v1488, %v1488
    %v2723 = vpack.c.bf16 %v1490, %v1490
    %v2724 = vpack.c.bf16 %v1493, %v1493
    %v2725 = vpack.c.bf16 %v1495, %v1495
    %v2726 = vpack.c.bf16 %v1498, %v1498
    %v2727 = vpack.c.bf16 %v1500, %v1500
    %v2728 = vpack.c.bf16 %v1503, %v1503
    %v2729 = vpack.c.bf16 %v1505, %v1505
    %2768 = vrot.lane.b32.xlu0 %v2692, 1
    %v2769 = vpop.permute.xlu0 %2768
    %2770 = vrot.lane.b32.xlu0 %v2693, 1
    %v2771 = vpop.permute.xlu0 %2770
    %2772 = vrot.lane.b32.xlu0 %v2694, 1
    %v2773 = vpop.permute.xlu0 %2772
    %2774 = vrot.lane.b32.xlu0 %v2695, 1
    %v2775 = vpop.permute.xlu0 %2774
    %2776 = vrot.lane.b32.xlu0 %v2696, 1
    %v2777 = vpop.permute.xlu0 %2776
    %2778 = vrot.lane.b32.xlu0 %v2697, 1
    %v2779 = vpop.permute.xlu0 %2778
    %2780 = vrot.lane.b32.xlu0 %v2698, 1
    %v2781 = vpop.permute.xlu0 %2780
    %2782 = vrot.lane.b32.xlu0 %v2699, 1
    %v2783 = vpop.permute.xlu0 %2782
    %2784 = vrot.lane.b32.xlu0 %v2700, 1
    %v2785 = vpop.permute.xlu0 %2784
    %2786 = vrot.lane.b32.xlu0 %v2701, 1
    %v2787 = vpop.permute.xlu0 %2786
    %2788 = vrot.lane.b32.xlu0 %v2702, 1
    %v2789 = vpop.permute.xlu0 %2788
    %2790 = vrot.lane.b32.xlu0 %v2703, 1
    %v2791 = vpop.permute.xlu0 %2790
    %2792 = vrot.lane.b32.xlu0 %v2704, 1
    %v2793 = vpop.permute.xlu0 %2792
    %2794 = vrot.lane.b32.xlu0 %v2705, 1
    %v2795 = vpop.permute.xlu0 %2794
    %2796 = vrot.lane.b32.xlu0 %v2706, 1
    %v2797 = vpop.permute.xlu0 %2796
    %2798 = vrot.lane.b32.xlu0 %v2707, 1
    %v2799 = vpop.permute.xlu0 %2798
    %2800 = vrot.lane.b32.xlu0 %v2708, 1
    %v2801 = vpop.permute.xlu0 %2800
    %2802 = vrot.lane.b32.xlu0 %v2709, 1
    %v2803 = vpop.permute.xlu0 %2802
    %2804 = vrot.lane.b32.xlu0 %v2710, 1
    %v2805 = vpop.permute.xlu0 %2804
    %2806 = vrot.lane.b32.xlu0 %v2711, 1
    %v2807 = vpop.permute.xlu0 %2806
    %2808 = vrot.lane.b32.xlu0 %v2712, 1
    %v2809 = vpop.permute.xlu0 %2808
    %2810 = vrot.lane.b32.xlu0 %v2713, 1
    %v2811 = vpop.permute.xlu0 %2810
    %2812 = vrot.lane.b32.xlu0 %v2714, 1
    %v2813 = vpop.permute.xlu0 %2812
    %2814 = vrot.lane.b32.xlu0 %v2715, 1
    %v2815 = vpop.permute.xlu0 %2814
    %2816 = vrot.lane.b32.xlu0 %v2716, 1
    %v2817 = vpop.permute.xlu0 %2816
    %2818 = vrot.lane.b32.xlu0 %v2717, 1
    %v2819 = vpop.permute.xlu0 %2818
    %2820 = vrot.lane.b32.xlu0 %v2718, 1
    %v2821 = vpop.permute.xlu0 %2820
    %2822 = vrot.lane.b32.xlu0 %v2719, 1
    %v2823 = vpop.permute.xlu0 %2822
    %2824 = vrot.lane.b32.xlu0 %v2720, 1
    %v2825 = vpop.permute.xlu0 %2824
    %2826 = vrot.lane.b32.xlu0 %v2721, 1
    %v2827 = vpop.permute.xlu0 %2826
    %2828 = vrot.lane.b32.xlu0 %v2722, 1
    %v2829 = vpop.permute.xlu0 %2828
    %2830 = vrot.lane.b32.xlu0 %v2723, 1
    %v2831 = vpop.permute.xlu0 %2830
    %2832 = vrot.lane.b32.xlu0 %v2724, 1
    %v2833 = vpop.permute.xlu0 %2832
    %2834 = vrot.lane.b32.xlu0 %v2725, 1
    %v2835 = vpop.permute.xlu0 %2834
    %2836 = vrot.lane.b32.xlu0 %v2726, 1
    %v2837 = vpop.permute.xlu0 %2836
    %2838 = vrot.lane.b32.xlu0 %v2727, 1
    %v2839 = vpop.permute.xlu0 %2838
    %2840 = vrot.lane.b32.xlu0 %v2728, 1
    %v2841 = vpop.permute.xlu0 %2840
    %2842 = vrot.lane.b32.xlu0 %v2729, 1
    %v2843 = vpop.permute.xlu0 %2842
    %vm2882 = vcmask 19464
    %2883 = vst.msk [vmem:[#allocation8] sm:$0xf] %vm2882, %v2769
    %2884 = vst.msk [vmem:[#allocation8 + $0x4] sm:$0xf] %vm2882, %v2771
    %2885 = vst.msk [vmem:[#allocation8 + $0x8] sm:$0xf] %vm2882, %v2773
    %2886 = vst.msk [vmem:[#allocation8 + $0xc] sm:$0xf] %vm2882, %v2775
    %2887 = vst.msk [vmem:[#allocation8 + $0x10] sm:$0xf] %vm2882, %v2777
    %2888 = vst.msk [vmem:[#allocation8 + $0x14] sm:$0xf] %vm2882, %v2779
    %2889 = vst.msk [vmem:[#allocation8 + $0x18] sm:$0xf] %vm2882, %v2781
    %2890 = vst.msk [vmem:[#allocation8 + $0x1c] sm:$0xf] %vm2882, %v2783
    %2891 = vst.msk [vmem:[#allocation8 + $0x20] sm:$0xf] %vm2882, %v2785
    %2892 = vst.msk [vmem:[#allocation8 + $0x24] sm:$0xf] %vm2882, %v2787
    %2893 = vst.msk [vmem:[#allocation8 + $0x28] sm:$0xf] %vm2882, %v2789
    %2894 = vst.msk [vmem:[#allocation8 + $0x2c] sm:$0xf] %vm2882, %v2791
    %2895 = vst.msk [vmem:[#allocation8 + $0x30] sm:$0xf] %vm2882, %v2793
    %2896 = vst.msk [vmem:[#allocation8 + $0x34] sm:$0xf] %vm2882, %v2795
    %2897 = vst.msk [vmem:[#allocation8 + $0x38] sm:$0xf] %vm2882, %v2797
    %2898 = vst.msk [vmem:[#allocation8 + $0x3c] sm:$0xf] %vm2882, %v2799
    %2899 = vst.msk [vmem:[#allocation8 + $0x40] sm:$0xf] %vm2882, %v2801
    %2900 = vst.msk [vmem:[#allocation8 + $0x44] sm:$0xf] %vm2882, %v2803
    %2901 = vst.msk [vmem:[#allocation8 + $0x48] sm:$0xf] %vm2882, %v2805
    %2902 = vst.msk [vmem:[#allocation8 + $0x4c] sm:$0xf] %vm2882, %v2807
    %2903 = vst.msk [vmem:[#allocation8 + $0x50] sm:$0xf] %vm2882, %v2809
    %2904 = vst.msk [vmem:[#allocation8 + $0x54] sm:$0xf] %vm2882, %v2811
    %2905 = vst.msk [vmem:[#allocation8 + $0x58] sm:$0xf] %vm2882, %v2813
    %2906 = vst.msk [vmem:[#allocation8 + $0x5c] sm:$0xf] %vm2882, %v2815
    %2907 = vst.msk [vmem:[#allocation8 + $0x60] sm:$0xf] %vm2882, %v2817
    %2908 = vst.msk [vmem:[#allocation8 + $0x64] sm:$0xf] %vm2882, %v2819
    %2909 = vst.msk [vmem:[#allocation8 + $0x68] sm:$0xf] %vm2882, %v2821
    %2910 = vst.msk [vmem:[#allocation8 + $0x6c] sm:$0xf] %vm2882, %v2823
    %2911 = vst.msk [vmem:[#allocation8 + $0x70] sm:$0xf] %vm2882, %v2825
    %2912 = vst.msk [vmem:[#allocation8 + $0x74] sm:$0xf] %vm2882, %v2827
    %2913 = vst.msk [vmem:[#allocation8 + $0x78] sm:$0xf] %vm2882, %v2829
    %2914 = vst.msk [vmem:[#allocation8 + $0x7c] sm:$0xf] %vm2882, %v2831
    %2915 = vst.msk [vmem:[#allocation8 + $0x80] sm:$0xf] %vm2882, %v2833
    %2916 = vst.msk [vmem:[#allocation8 + $0x84] sm:$0xf] %vm2882, %v2835
    %2917 = vst.msk [vmem:[#allocation8 + $0x88] sm:$0xf] %vm2882, %v2837
    %2918 = vst.msk [vmem:[#allocation8 + $0x8c] sm:$0xf] %vm2882, %v2839
    %2919 = vst.msk [vmem:[#allocation8 + $0x90] sm:$0xf] %vm2882, %v2841
    %2920 = vst.msk [vmem:[#allocation8 + $0x94] sm:$0xf] %vm2882, %v2843
    // Predicated region
    $region38: #{tpu_custom_call.1} parent=1 // pred_check
      _
    $region39: #{tpu_custom_call.1} parent=1 // pred_check_branch
      %2922 = sbr.rel (0) target = $region41
    $region40: #{tpu_custom_call.1} parent=1 // pred_region
      %2924 = vsyncadd [#allocation5], 0
      %s2925 = sshll.u32 [#allocation8], 4
      %s2926 = int_to_ptr.vmem [resolvable:$true] %s2925
      %s2927 = sshll.u32 %s7, 4
      %s2928 = int_to_ptr.hbm [resolvable:$true] %s2927
      %2933 = dma.vmem_to_hbm [thread:$0]  %s2926, 2432, %s2928, [#allocation5], 64, 64, 4
    $region41: #{tpu_custom_call.1} parent=1 // pred_fallthru
      _
    // Predicated region
    $region42: #{tpu_custom_call.1} parent=1 // pred_check
      _
    $region43: #{tpu_custom_call.1} parent=1 // pred_check_branch
      %2935 = sbr.rel (0) target = $region45
    $region44: #{tpu_custom_call.1} parent=1 // pred_region
      %2937 = dma.done [#allocation5], 2432
    $region45: #{tpu_custom_call.1} parent=1 // pred_fallthru
      _
    %2938 = vsyncpa [#allocation4], 1
    %2939 = vsyncpa [#allocation5], 1
    %2940 = vsyncpa [#allocation6], 1

</llo_original>
